<compile_context>
chip_gen: v7x
topology: tpu7x:2x2x1
jax: 0.10.0
libtpu: 0.0.40
codegen_flags: <defaults>
</compile_context>

<pallas_src>
import functools

import jax
import jax.numpy as jnp
from jax.experimental import pallas as pl
from jax.experimental.pallas import tpu as pltpu

# ----------------------------------------------------------------------------
# Fixed cell configuration (stands in for SEARCH_SPACE / OPS).
# ----------------------------------------------------------------------------
OP_NAMES = ("skip_connect", "conv_1x1_bn", "avg_pool_3x3")
N_OPS = len(OP_NAMES)
N_INPUTS = 2
STEPS = 4
BN_EPS = 1e-5


def fold_bn(gamma, beta):
    # running_mean = 0, running_var = 1 (fresh BatchNorm), eval-mode fold.
    scale = gamma / jnp.sqrt(1.0 + BN_EPS)
    return scale, beta


def _pool_masks(h, w, nb):
    """Boundary masks for the separable 3x3 avg pool (count_include_pad=True).

    Returns (4, nb*h*w) f32 {0,1} table (per-image masks tiled nb times):
      row 0: left  neighbour valid (c-1 >= 0)  -> pairs with roll(+1)
      row 1: right neighbour valid (c+1 <  w)  -> pairs with roll(-1)
      row 2: up    neighbour valid (r-1 >= 0)  -> pairs with roll(+w)
      row 3: down  neighbour valid (r+1 <  h)  -> pairs with roll(-w)
    Masks also kill the wrong values rolled across row / image boundaries.
    """
    idx = jnp.arange(h * w)
    r = idx // w
    c = idx % w
    m = jnp.stack(
        [(c - 1 >= 0), (c + 1 < w), (r - 1 >= 0), (r + 1 < h)], axis=0
    ).astype(jnp.float32)                          # (4, HW)
    return jnp.tile(m, (1, nb))                    # (4, nb*HW)


# ----------------------------------------------------------------------------
# Fused cell kernel. One grid step = one lane block (NB images x HW pixels).
# Ref order (inputs, outputs, scratch):
#   x_ref      : (n_in*Cp, L)   bf16  both inputs, channel-major, batch in lanes
#   pre_w_ref  : (n_in*C, n_in*Cp) bf16 block-diag BN-folded 1x1 preprocess conv
#   pre_b_ref  : (n_in*C, 1)    f32   preprocess bias (folded BN beta)
#   w_ref[i]   : (2C, (n_in+i)*C) bf16 per-step [conv+skip ; pool-gather] stack
#   step_b_ref : (steps*C, 1)   f32   per-step summed conv bias
#   mask_ref   : (4, L)         f32   pool boundary masks
#   o_ref      : (steps*C, L)   f32   concatenated step outputs (lane-dense)
#   st_ref     : (K_max, L)     bf16  VMEM scratch holding all source states
# ----------------------------------------------------------------------------
def _cell_kernel(*refs, cfg):
    n_inputs, steps, c, shifts = cfg
    x_ref, pre_w_ref, pre_b_ref = refs[0], refs[1], refs[2]
    step_w_refs = refs[3:3 + steps]
    step_b_ref = refs[3 + steps]
    mask_ref = refs[4 + steps]
    o_ref = refs[5 + steps]
    st_ref = refs[6 + steps]

    sh_l, sh_r, sh_u, sh_d = shifts          # normalized roll amounts
    m_l = mask_ref[0:1, :]
    m_r = mask_ref[1:2, :]
    m_u = mask_ref[2:3, :]
    m_d = mask_ref[3:4, :]

    def avg_pool_3x3(x):
        # Separable 3x3 box sum (zero pad) on the XLU, /9 (count_include_pad).
        h = (x + pltpu.roll(x, shift=sh_l, axis=1) * m_l
               + pltpu.roll(x, shift=sh_r, axis=1) * m_r)
        v = (h + pltpu.roll(h, shift=sh_u, axis=1) * m_u
               + pltpu.roll(h, shift=sh_d, axis=1) * m_d)
        return v * (1.0 / 9.0)

    # --- Preprocess: both inputs via one block-diagonal 1x1-conv+BN matmul ---
    pre = jnp.dot(pre_w_ref[...], x_ref[...],
                  preferred_element_type=jnp.float32) + pre_b_ref[...]
    st_ref[0:n_inputs * c, :] = pre.astype(st_ref.dtype)

    # --- Steps: one K-stacked matmul per target step -------------------------
    for i in range(steps):
        k_i = (n_inputs + i) * c
        src = st_ref[0:k_i, :]                                    # (K_i, L) bf16
        comb = jnp.dot(step_w_refs[i][...], src,
                       preferred_element_type=jnp.float32)        # (2C, L) f32
        conv_skip = comb[0:c, :] + step_b_ref[i * c:(i + 1) * c, :]
        pooled = avg_pool_3x3(comb[c:2 * c, :])
        s = conv_skip + pooled                                    # (C, L) f32
        o_ref[i * c:(i + 1) * c, :] = s.astype(o_ref.dtype)
        if i < steps - 1:                      # last state is never re-consumed
            st_ref[k_i:k_i + c, :] = s.astype(st_ref.dtype)


# ----------------------------------------------------------------------------
# Wrapper: fold BN + gates into per-step weight stacks, run the fused kernel.
#   inputs       : tuple of n_inputs NCHW tensors (N, C_prev, H, W)
#   arch_weights : (n_edges, N_OPS)
#   returns      : (N, steps*C_curr, H, W)  (same layout as PyTorch output)
# ----------------------------------------------------------------------------
def cell_forward(inputs, arch_weights, params, n_inputs=N_INPUTS, steps=STEPS):
    N, C_prev, H, W = inputs[0].shape
    C = params["pre_w"].shape[1]
    HW = H * W

    # Lane-block count: single-TC chips (v5e/v6e) want one wide call; v7x has
    # two TensorCores, so give it a 2-way "parallel" lane split when possible.
    nblk = 1
    try:
        kind = jax.devices()[0].device_kind.lower()
        if ("v7" in kind or "tpu7" in kind) and N % 2 == 0 and N >= 2:
            nblk = 2
    except Exception:
        pass
    NB = N // nblk
    L = NB * HW
    assert L % 128 == 0, "lane block (batch*H*W) must be a multiple of 128"

    # ---- MixedOp gating: w if w > 0.001 else 0 ------------------------------
    g = jnp.where(arch_weights > 0.001, arch_weights, 0.0).astype(jnp.float32)
    g_skip, g_conv, g_pool = g[:, 0], g[:, 1], g[:, 2]

    # ---- Preprocess: BN-folded 1x1 convs fused into one block-diag matrix ---
    pre_scale, pre_bias = fold_bn(params["pre_gamma"], params["pre_beta"])
    pre_w_bd = jnp.zeros((n_inputs * C, n_inputs * C_prev), jnp.float32)
    for j in range(n_inputs):
        blk = params["pre_w"][j] * pre_scale[j][:, None]          # (C, Cp)
        pre_w_bd = pre_w_bd.at[j * C:(j + 1) * C,
                               j * C_prev:(j + 1) * C_prev].set(blk)
    pre_b = pre_bias.reshape(n_inputs * C, 1).astype(jnp.float32)

    # ---- Edges: fold BN scale, conv gate and skip gate into one matrix ------
    e_scale, e_beta = fold_bn(params["edge_gamma"], params["edge_beta"])
    eye = jnp.eye(C, dtype=jnp.float32)
    M = (g_conv[:, None, None] * e_scale[:, :, None] * params["edge_w"]
         + g_skip[:, None, None] * eye[None])                     # (n_edges,C,C)
    G = g_pool[:, None, None] * eye[None]                         # (n_edges,C,C)
    b = g_conv[:, None] * e_beta                                  # (n_edges, C)

    # Per TARGET step: K-stack the consuming edges (source-state order) and
    # M-stack [conv+skip ; pool-gather] -> one (2C, K_i) bf16 matmul operand.
    step_ws, step_bs = [], []
    e = 0
    for i in range(steps):
        k = n_inputs + i
        top = jnp.concatenate([M[e + j] for j in range(k)], axis=1)   # (C, k*C)
        bot = jnp.concatenate([G[e + j] for j in range(k)], axis=1)   # (C, k*C)
        step_ws.append(
            jnp.concatenate([top, bot], axis=0).astype(jnp.bfloat16))  # (2C,k*C)
        step_bs.append(jnp.sum(b[e:e + k], axis=0))                    # (C,)
        e += k
    n_edges = e
    step_b = jnp.concatenate(step_bs).reshape(steps * C, 1).astype(jnp.float32)

    # ---- Input layout: channel-major, (batch, spatial) collapsed to lanes ---
    x_stk = jnp.concatenate(
        [xx.transpose(1, 0, 2, 3).reshape(C_prev, N * HW) for xx in inputs],
        axis=0)                                                    # (n_in*Cp,N*HW)

    masks = _pool_masks(H, W, NB)                                  # (4, L)
    shifts = (1 % L, (-1) % L, W % L, (-W) % L)                    # l, r, u, d

    k_max = (n_inputs + steps - 1) * C
    cfg = (n_inputs, steps, C, shifts)
    kernel = functools.partial(_cell_kernel, cfg=cfg)

    # Advisory cost estimate so XLA can overlap the call with surrounding ops.
    flops = 2 * (n_inputs * C) * (n_inputs * C_prev) * (N * HW)
    for i in range(steps):
        flops += 2 * (2 * C) * ((n_inputs + i) * C) * (N * HW)
    flops += steps * 12 * C * (N * HW)                  # pool rolls / bias adds
    bytes_accessed = (x_stk.size * 2 + pre_w_bd.size * 2 + pre_b.size * 4
                      + sum(int(w.size) for w in step_ws) * 2 + step_b.size * 4
                      + masks.size * 4 + steps * C * N * HW * 4)

    out = pl.pallas_call(
        kernel,
        out_shape=jax.ShapeDtypeStruct((steps * C, N * HW), inputs[0].dtype),
        grid=(nblk,),
        in_specs=[
            pl.BlockSpec((n_inputs * C_prev, L), lambda bi: (0, bi)),       # x
            pl.BlockSpec((n_inputs * C, n_inputs * C_prev), lambda bi: (0, 0)),
            pl.BlockSpec((n_inputs * C, 1), lambda bi: (0, 0)),             # pre_b
        ] + [
            pl.BlockSpec((2 * C, (n_inputs + i) * C), lambda bi: (0, 0))    # W_i
            for i in range(steps)
        ] + [
            pl.BlockSpec((steps * C, 1), lambda bi: (0, 0)),                # step_b
            pl.BlockSpec((4, L), lambda bi: (0, 0)),                        # masks
        ],
        out_specs=pl.BlockSpec((steps * C, L), lambda bi: (0, bi)),
        scratch_shapes=[pltpu.VMEM((k_max, L), jnp.bfloat16)],
        compiler_params=pltpu.CompilerParams(
            dimension_semantics=("parallel",)),
        cost_estimate=pl.CostEstimate(
            flops=int(flops), transcendentals=0,
            bytes_accessed=int(bytes_accessed)),
    )(x_stk.astype(jnp.bfloat16), pre_w_bd.astype(jnp.bfloat16), pre_b,
      *step_ws, step_b, masks)

    # (steps*C, N, H, W) -> (N, steps*C, H, W): identical to torch.cat(dim=1).
    return out.reshape(steps * C, N, H, W).transpose(1, 0, 2, 3)


# ----------------------------------------------------------------------------
# Parameter init (deterministic, synthetic).  Conv weights use the PyTorch
# (C_out, C_in) orientation.
# ----------------------------------------------------------------------------
def init_cell_params(key, C_prev, C_curr, n_inputs=N_INPUTS, steps=STEPS):
    n_edges = sum(n_inputs + i for i in range(steps))
    k = jax.random.split(key, 6)
    params = {
        "pre_w": 0.1 * jax.random.normal(k[0], (n_inputs, C_curr, C_prev), jnp.float32),
        "pre_gamma": 1.0 + 0.1 * jax.random.normal(k[1], (n_inputs, C_curr), jnp.float32),
        "pre_beta": 0.1 * jax.random.normal(k[2], (n_inputs, C_curr), jnp.float32),
        "edge_w": 0.1 * jax.random.normal(k[3], (n_edges, C_curr, C_curr), jnp.float32),
        "edge_gamma": 1.0 + 0.1 * jax.random.normal(k[4], (n_edges, C_curr), jnp.float32),
        "edge_beta": 0.1 * jax.random.normal(k[5], (n_edges, C_curr), jnp.float32),
    }
    return params, n_edges


# ----------------------------------------------------------------------------
# Pure-JAX reference (NCHW), mirrors Cell.forward, for a sanity check.
# ----------------------------------------------------------------------------
def _reference_cell(inputs, arch_weights, params, n_inputs=N_INPUTS, steps=STEPS):
    g = jnp.where(arch_weights > 0.001, arch_weights, 0.0)

    def avg_pool(x):
        xp = jnp.pad(x, ((0, 0), (0, 0), (1, 1), (1, 1)))
        acc = 0.0
        for dh in range(3):
            for dw in range(3):
                acc = acc + xp[:, :, dh:dh + x.shape[2], dw:dw + x.shape[3]]
        return acc / 9.0

    states = []
    for i in range(n_inputs):
        scale, bias = fold_bn(params["pre_gamma"][i], params["pre_beta"][i])
        y = jnp.einsum("oc,nchw->nohw", params["pre_w"][i], inputs[i])
        states.append(y * scale[None, :, None, None] + bias[None, :, None, None])

    e = 0
    for i in range(steps):
        s = 0.0
        for j in range(n_inputs + i):
            h = states[j]
            scale, bias = fold_bn(params["edge_gamma"][e], params["edge_beta"][e])
            conv = jnp.einsum("oc,nchw->nohw", params["edge_w"][e], h)
            conv = conv * scale[None, :, None, None] + bias[None, :, None, None]
            s = s + g[e, 0] * h + g[e, 1] * conv + g[e, 2] * avg_pool(h)
            e += 1
        states.append(s)
    return jnp.concatenate(states[-steps:], axis=1)


# ----------------------------------------------------------------------------
# Main
# ----------------------------------------------------------------------------
if __name__ == "__main__":
    key = jax.random.PRNGKey(0)
    k_in0, k_in1, k_w, k_p = jax.random.split(key, 4)

    N, H, W = 2, 16, 16
    C_prev, C_curr = 8, 16

    # Two cell inputs, NCHW (matches the PyTorch module).
    x0 = jax.random.normal(k_in0, (N, C_prev, H, W), jnp.float32)
    x1 = jax.random.normal(k_in1, (N, C_prev, H, W), jnp.float32)

    params, n_edges = init_cell_params(k_p, C_prev, C_curr)

    # Architecture weights: (n_edges, n_ops), softmax over ops per edge.
    arch_weights = jax.nn.softmax(
        jax.random.normal(k_w, (n_edges, N_OPS), jnp.float32), axis=-1)

    fwd = jax.jit(cell_forward)
    out = jax.block_until_ready(fwd((x0, x1), arch_weights, params))

    expected_shape = (N, STEPS * C_curr, H, W)
    assert out.shape == expected_shape, (out.shape, expected_shape)
    assert bool(jnp.all(jnp.isfinite(out)))

    ref = _reference_cell((x0, x1), arch_weights, params)
    assert bool(jnp.allclose(out, ref, rtol=2e-2, atol=2e-2)), "mismatch vs reference"

    print("KERNEL_OK")
</pallas_src>

<mosaic_0001>
module attributes {stable_mosaic.version = 11 : i64} {
  func.func @_cell_kernel(%arg0: i32, %arg1: memref<16x512xbf16, #tpu.memory_space<vmem>>, %arg2: memref<32x16xbf16, #tpu.memory_space<vmem>>, %arg3: memref<32x1xf32, #tpu.memory_space<vmem>>, %arg4: memref<32x32xbf16, #tpu.memory_space<vmem>>, %arg5: memref<32x48xbf16, #tpu.memory_space<vmem>>, %arg6: memref<32x64xbf16, #tpu.memory_space<vmem>>, %arg7: memref<32x80xbf16, #tpu.memory_space<vmem>>, %arg8: memref<64x1xf32, #tpu.memory_space<vmem>>, %arg9: memref<4x512xf32, #tpu.memory_space<vmem>>, %arg10: memref<64x512xf32, #tpu.memory_space<vmem>>, %arg11: memref<80x512xbf16, #tpu.memory_space<vmem>>) attributes {dimension_semantics = [#tpu.dimension_semantics<parallel>], iteration_bounds = array<i64: 1>, scalar_prefetch = 0 : i64, scratch_operands = 1 : i64, tpu.core_type = #tpu.core_type<tc>, window_params = [{transform_indices = @transform_0, window_bounds = array<i64: 16, 512>}, {pipeline_mode = #tpu.pipeline_mode<synchronous>, transform_indices = @transform_1, window_bounds = array<i64: 32, 16>}, {pipeline_mode = #tpu.pipeline_mode<synchronous>, transform_indices = @transform_2, window_bounds = array<i64: 32, 1>}, {pipeline_mode = #tpu.pipeline_mode<synchronous>, transform_indices = @transform_3, window_bounds = array<i64: 32, 32>}, {pipeline_mode = #tpu.pipeline_mode<synchronous>, transform_indices = @transform_4, window_bounds = array<i64: 32, 48>}, {pipeline_mode = #tpu.pipeline_mode<synchronous>, transform_indices = @transform_5, window_bounds = array<i64: 32, 64>}, {pipeline_mode = #tpu.pipeline_mode<synchronous>, transform_indices = @transform_6, window_bounds = array<i64: 32, 80>}, {pipeline_mode = #tpu.pipeline_mode<synchronous>, transform_indices = @transform_7, window_bounds = array<i64: 64, 1>}, {pipeline_mode = #tpu.pipeline_mode<synchronous>, transform_indices = @transform_8, window_bounds = array<i64: 4, 512>}, {transform_indices = @transform_9, window_bounds = array<i64: 64, 512>}]} {
    %c0 = arith.constant 0 : index
    %c0_0 = arith.constant 0 : index
    %0 = vector.load %arg9[%c0, %c0_0] : memref<4x512xf32, #tpu.memory_space<vmem>>, vector<1x512xf32>
    %c1 = arith.constant 1 : index
    %c0_1 = arith.constant 0 : index
    %1 = vector.load %arg9[%c1, %c0_1] : memref<4x512xf32, #tpu.memory_space<vmem>>, vector<1x512xf32>
    %c2 = arith.constant 2 : index
    %c0_2 = arith.constant 0 : index
    %2 = vector.load %arg9[%c2, %c0_2] : memref<4x512xf32, #tpu.memory_space<vmem>>, vector<1x512xf32>
    %c3 = arith.constant 3 : index
    %c0_3 = arith.constant 0 : index
    %3 = vector.load %arg9[%c3, %c0_3] : memref<4x512xf32, #tpu.memory_space<vmem>>, vector<1x512xf32>
    %c0_4 = arith.constant 0 : index
    %c0_5 = arith.constant 0 : index
    %4 = vector.load %arg2[%c0_4, %c0_5] : memref<32x16xbf16, #tpu.memory_space<vmem>>, vector<32x16xbf16>
    %c0_6 = arith.constant 0 : index
    %c0_7 = arith.constant 0 : index
    %5 = vector.load %arg1[%c0_6, %c0_7] : memref<16x512xbf16, #tpu.memory_space<vmem>>, vector<16x512xbf16>
    %cst = arith.constant dense<0.000000e+00> : vector<32x512xf32>
    %6 = tpu.matmul %4, %5, %cst {dimension_numbers = #tpu.dot_dimension_numbers<[1], [0], [0], [1], [0, 0, 1, 1], [], []>} : vector<32x16xbf16>, vector<16x512xbf16>, vector<32x512xf32> -> vector<32x512xf32>
    %c0_8 = arith.constant 0 : index
    %c0_9 = arith.constant 0 : index
    %7 = vector.load %arg3[%c0_8, %c0_9] : memref<32x1xf32, #tpu.memory_space<vmem>>, vector<32x1xf32>
    %8 = vector.broadcast %7 : vector<32x1xf32> to vector<32x512xf32>
    %9 = arith.addf %6, %8 : vector<32x512xf32>
    %10 = arith.truncf %9 : vector<32x512xf32> to vector<32x512xbf16>
    %c0_10 = arith.constant 0 : index
    %c0_11 = arith.constant 0 : index
    %11 = vector.load %arg11[%c0_10, %c0_11] : memref<80x512xbf16, #tpu.memory_space<vmem>>, vector<32x512xbf16>
    tpu.vector_store %arg11[%c0_10, %c0_11], %10 {strides = array<i32>} : memref<80x512xbf16, #tpu.memory_space<vmem>>, vector<32x512xbf16>,
    %c0_12 = arith.constant 0 : index
    %c0_13 = arith.constant 0 : index
    %12 = vector.load %arg11[%c0_12, %c0_13] : memref<80x512xbf16, #tpu.memory_space<vmem>>, vector<32x512xbf16>
    %c0_14 = arith.constant 0 : index
    %c0_15 = arith.constant 0 : index
    %13 = vector.load %arg4[%c0_14, %c0_15] : memref<32x32xbf16, #tpu.memory_space<vmem>>, vector<32x32xbf16>
    %cst_16 = arith.constant dense<0.000000e+00> : vector<32x512xf32>
    %14 = tpu.matmul %13, %12, %cst_16 {dimension_numbers = #tpu.dot_dimension_numbers<[1], [0], [0], [1], [0, 0, 1, 1], [], []>} : vector<32x32xbf16>, vector<32x512xbf16>, vector<32x512xf32> -> vector<32x512xf32>
    %15 = vector.extract_strided_slice %14 {offsets = [0, 0], sizes = [16, 512], strides = [1, 1]} : vector<32x512xf32> to vector<16x512xf32>
    %c0_17 = arith.constant 0 : index
    %c0_18 = arith.constant 0 : index
    %16 = vector.load %arg8[%c0_17, %c0_18] : memref<64x1xf32, #tpu.memory_space<vmem>>, vector<16x1xf32>
    %17 = vector.broadcast %16 : vector<16x1xf32> to vector<16x512xf32>
    %18 = arith.addf %15, %17 : vector<16x512xf32>
    %19 = vector.extract_strided_slice %14 {offsets = [16, 0], sizes = [16, 512], strides = [1, 1]} : vector<32x512xf32> to vector<16x512xf32>
    %c1_i32 = arith.constant 1 : i32
    %20 = tpu.dynamic_rotate %19 by %c1_i32 dim 1 : vector<16x512xf32>, i32 -> vector<16x512xf32>
    %21 = vector.broadcast %0 : vector<1x512xf32> to vector<16x512xf32>
    %22 = arith.mulf %20, %21 : vector<16x512xf32>
    %23 = arith.addf %19, %22 : vector<16x512xf32>
    %c511_i32 = arith.constant 511 : i32
    %24 = tpu.dynamic_rotate %19 by %c511_i32 dim 1 : vector<16x512xf32>, i32 -> vector<16x512xf32>
    %25 = vector.broadcast %1 : vector<1x512xf32> to vector<16x512xf32>
    %26 = arith.mulf %24, %25 : vector<16x512xf32>
    %27 = arith.addf %23, %26 : vector<16x512xf32>
    %c16_i32 = arith.constant 16 : i32
    %28 = tpu.dynamic_rotate %27 by %c16_i32 dim 1 : vector<16x512xf32>, i32 -> vector<16x512xf32>
    %29 = vector.broadcast %2 : vector<1x512xf32> to vector<16x512xf32>
    %30 = arith.mulf %28, %29 : vector<16x512xf32>
    %31 = arith.addf %27, %30 : vector<16x512xf32>
    %c496_i32 = arith.constant 496 : i32
    %32 = tpu.dynamic_rotate %27 by %c496_i32 dim 1 : vector<16x512xf32>, i32 -> vector<16x512xf32>
    %33 = vector.broadcast %3 : vector<1x512xf32> to vector<16x512xf32>
    %34 = arith.mulf %32, %33 : vector<16x512xf32>
    %35 = arith.addf %31, %34 : vector<16x512xf32>
    %cst_19 = arith.constant 0.111111112 : f32
    %36 = vector.broadcast %cst_19 : f32 to vector<16x512xf32>
    %37 = arith.mulf %35, %36 : vector<16x512xf32>
    %38 = arith.addf %18, %37 : vector<16x512xf32>
    %c0_20 = arith.constant 0 : index
    %c0_21 = arith.constant 0 : index
    %39 = vector.load %arg10[%c0_20, %c0_21] : memref<64x512xf32, #tpu.memory_space<vmem>>, vector<16x512xf32>
    tpu.vector_store %arg10[%c0_20, %c0_21], %38 {strides = array<i32>} : memref<64x512xf32, #tpu.memory_space<vmem>>, vector<16x512xf32>,
    %40 = arith.truncf %38 : vector<16x512xf32> to vector<16x512xbf16>
    %c32 = arith.constant 32 : index
    %c0_22 = arith.constant 0 : index
    %41 = vector.load %arg11[%c32, %c0_22] : memref<80x512xbf16, #tpu.memory_space<vmem>>, vector<16x512xbf16>
    tpu.vector_store %arg11[%c32, %c0_22], %40 {strides = array<i32>} : memref<80x512xbf16, #tpu.memory_space<vmem>>, vector<16x512xbf16>,
    %c0_23 = arith.constant 0 : index
    %c0_24 = arith.constant 0 : index
    %42 = vector.load %arg11[%c0_23, %c0_24] : memref<80x512xbf16, #tpu.memory_space<vmem>>, vector<48x512xbf16>
    %c0_25 = arith.constant 0 : index
    %c0_26 = arith.constant 0 : index
    %43 = vector.load %arg5[%c0_25, %c0_26] : memref<32x48xbf16, #tpu.memory_space<vmem>>, vector<32x48xbf16>
    %cst_27 = arith.constant dense<0.000000e+00> : vector<32x512xf32>
    %44 = tpu.matmul %43, %42, %cst_27 {dimension_numbers = #tpu.dot_dimension_numbers<[1], [0], [0], [1], [0, 0, 1, 1], [], []>} : vector<32x48xbf16>, vector<48x512xbf16>, vector<32x512xf32> -> vector<32x512xf32>
    %45 = vector.extract_strided_slice %44 {offsets = [0, 0], sizes = [16, 512], strides = [1, 1]} : vector<32x512xf32> to vector<16x512xf32>
    %c16 = arith.constant 16 : index
    %c0_28 = arith.constant 0 : index
    %46 = vector.load %arg8[%c16, %c0_28] : memref<64x1xf32, #tpu.memory_space<vmem>>, vector<16x1xf32>
    %47 = vector.broadcast %46 : vector<16x1xf32> to vector<16x512xf32>
    %48 = arith.addf %45, %47 : vector<16x512xf32>
    %49 = vector.extract_strided_slice %44 {offsets = [16, 0], sizes = [16, 512], strides = [1, 1]} : vector<32x512xf32> to vector<16x512xf32>
    %c1_i32_29 = arith.constant 1 : i32
    %50 = tpu.dynamic_rotate %49 by %c1_i32_29 dim 1 : vector<16x512xf32>, i32 -> vector<16x512xf32>
    %51 = vector.broadcast %0 : vector<1x512xf32> to vector<16x512xf32>
    %52 = arith.mulf %50, %51 : vector<16x512xf32>
    %53 = arith.addf %49, %52 : vector<16x512xf32>
    %c511_i32_30 = arith.constant 511 : i32
    %54 = tpu.dynamic_rotate %49 by %c511_i32_30 dim 1 : vector<16x512xf32>, i32 -> vector<16x512xf32>
    %55 = vector.broadcast %1 : vector<1x512xf32> to vector<16x512xf32>
    %56 = arith.mulf %54, %55 : vector<16x512xf32>
    %57 = arith.addf %53, %56 : vector<16x512xf32>
    %c16_i32_31 = arith.constant 16 : i32
    %58 = tpu.dynamic_rotate %57 by %c16_i32_31 dim 1 : vector<16x512xf32>, i32 -> vector<16x512xf32>
    %59 = vector.broadcast %2 : vector<1x512xf32> to vector<16x512xf32>
    %60 = arith.mulf %58, %59 : vector<16x512xf32>
    %61 = arith.addf %57, %60 : vector<16x512xf32>
    %c496_i32_32 = arith.constant 496 : i32
    %62 = tpu.dynamic_rotate %57 by %c496_i32_32 dim 1 : vector<16x512xf32>, i32 -> vector<16x512xf32>
    %63 = vector.broadcast %3 : vector<1x512xf32> to vector<16x512xf32>
    %64 = arith.mulf %62, %63 : vector<16x512xf32>
    %65 = arith.addf %61, %64 : vector<16x512xf32>
    %cst_33 = arith.constant 0.111111112 : f32
    %66 = vector.broadcast %cst_33 : f32 to vector<16x512xf32>
    %67 = arith.mulf %65, %66 : vector<16x512xf32>
    %68 = arith.addf %48, %67 : vector<16x512xf32>
    %c16_34 = arith.constant 16 : index
    %c0_35 = arith.constant 0 : index
    %69 = vector.load %arg10[%c16_34, %c0_35] : memref<64x512xf32, #tpu.memory_space<vmem>>, vector<16x512xf32>
    tpu.vector_store %arg10[%c16_34, %c0_35], %68 {strides = array<i32>} : memref<64x512xf32, #tpu.memory_space<vmem>>, vector<16x512xf32>,
    %70 = arith.truncf %68 : vector<16x512xf32> to vector<16x512xbf16>
    %c48 = arith.constant 48 : index
    %c0_36 = arith.constant 0 : index
    %71 = vector.load %arg11[%c48, %c0_36] : memref<80x512xbf16, #tpu.memory_space<vmem>>, vector<16x512xbf16>
    tpu.vector_store %arg11[%c48, %c0_36], %70 {strides = array<i32>} : memref<80x512xbf16, #tpu.memory_space<vmem>>, vector<16x512xbf16>,
    %c0_37 = arith.constant 0 : index
    %c0_38 = arith.constant 0 : index
    %72 = vector.load %arg11[%c0_37, %c0_38] : memref<80x512xbf16, #tpu.memory_space<vmem>>, vector<64x512xbf16>
    %c0_39 = arith.constant 0 : index
    %c0_40 = arith.constant 0 : index
    %73 = vector.load %arg6[%c0_39, %c0_40] : memref<32x64xbf16, #tpu.memory_space<vmem>>, vector<32x64xbf16>
    %cst_41 = arith.constant dense<0.000000e+00> : vector<32x512xf32>
    %74 = tpu.matmul %73, %72, %cst_41 {dimension_numbers = #tpu.dot_dimension_numbers<[1], [0], [0], [1], [0, 0, 1, 1], [], []>} : vector<32x64xbf16>, vector<64x512xbf16>, vector<32x512xf32> -> vector<32x512xf32>
    %75 = vector.extract_strided_slice %74 {offsets = [0, 0], sizes = [16, 512], strides = [1, 1]} : vector<32x512xf32> to vector<16x512xf32>
    %c32_42 = arith.constant 32 : index
    %c0_43 = arith.constant 0 : index
    %76 = vector.load %arg8[%c32_42, %c0_43] : memref<64x1xf32, #tpu.memory_space<vmem>>, vector<16x1xf32>
    %77 = vector.broadcast %76 : vector<16x1xf32> to vector<16x512xf32>
    %78 = arith.addf %75, %77 : vector<16x512xf32>
    %79 = vector.extract_strided_slice %74 {offsets = [16, 0], sizes = [16, 512], strides = [1, 1]} : vector<32x512xf32> to vector<16x512xf32>
    %c1_i32_44 = arith.constant 1 : i32
    %80 = tpu.dynamic_rotate %79 by %c1_i32_44 dim 1 : vector<16x512xf32>, i32 -> vector<16x512xf32>
    %81 = vector.broadcast %0 : vector<1x512xf32> to vector<16x512xf32>
    %82 = arith.mulf %80, %81 : vector<16x512xf32>
    %83 = arith.addf %79, %82 : vector<16x512xf32>
    %c511_i32_45 = arith.constant 511 : i32
    %84 = tpu.dynamic_rotate %79 by %c511_i32_45 dim 1 : vector<16x512xf32>, i32 -> vector<16x512xf32>
    %85 = vector.broadcast %1 : vector<1x512xf32> to vector<16x512xf32>
    %86 = arith.mulf %84, %85 : vector<16x512xf32>
    %87 = arith.addf %83, %86 : vector<16x512xf32>
    %c16_i32_46 = arith.constant 16 : i32
    %88 = tpu.dynamic_rotate %87 by %c16_i32_46 dim 1 : vector<16x512xf32>, i32 -> vector<16x512xf32>
    %89 = vector.broadcast %2 : vector<1x512xf32> to vector<16x512xf32>
    %90 = arith.mulf %88, %89 : vector<16x512xf32>
    %91 = arith.addf %87, %90 : vector<16x512xf32>
    %c496_i32_47 = arith.constant 496 : i32
    %92 = tpu.dynamic_rotate %87 by %c496_i32_47 dim 1 : vector<16x512xf32>, i32 -> vector<16x512xf32>
    %93 = vector.broadcast %3 : vector<1x512xf32> to vector<16x512xf32>
    %94 = arith.mulf %92, %93 : vector<16x512xf32>
    %95 = arith.addf %91, %94 : vector<16x512xf32>
    %cst_48 = arith.constant 0.111111112 : f32
    %96 = vector.broadcast %cst_48 : f32 to vector<16x512xf32>
    %97 = arith.mulf %95, %96 : vector<16x512xf32>
    %98 = arith.addf %78, %97 : vector<16x512xf32>
    %c32_49 = arith.constant 32 : index
    %c0_50 = arith.constant 0 : index
    %99 = vector.load %arg10[%c32_49, %c0_50] : memref<64x512xf32, #tpu.memory_space<vmem>>, vector<16x512xf32>
    tpu.vector_store %arg10[%c32_49, %c0_50], %98 {strides = array<i32>} : memref<64x512xf32, #tpu.memory_space<vmem>>, vector<16x512xf32>,
    %100 = arith.truncf %98 : vector<16x512xf32> to vector<16x512xbf16>
    %c64 = arith.constant 64 : index
    %c0_51 = arith.constant 0 : index
    %101 = vector.load %arg11[%c64, %c0_51] : memref<80x512xbf16, #tpu.memory_space<vmem>>, vector<16x512xbf16>
    tpu.vector_store %arg11[%c64, %c0_51], %100 {strides = array<i32>} : memref<80x512xbf16, #tpu.memory_space<vmem>>, vector<16x512xbf16>,
    %c0_52 = arith.constant 0 : index
    %c0_53 = arith.constant 0 : index
    %102 = vector.load %arg11[%c0_52, %c0_53] : memref<80x512xbf16, #tpu.memory_space<vmem>>, vector<80x512xbf16>
    %c0_54 = arith.constant 0 : index
    %c0_55 = arith.constant 0 : index
    %103 = vector.load %arg7[%c0_54, %c0_55] : memref<32x80xbf16, #tpu.memory_space<vmem>>, vector<32x80xbf16>
    %cst_56 = arith.constant dense<0.000000e+00> : vector<32x512xf32>
    %104 = tpu.matmul %103, %102, %cst_56 {dimension_numbers = #tpu.dot_dimension_numbers<[1], [0], [0], [1], [0, 0, 1, 1], [], []>} : vector<32x80xbf16>, vector<80x512xbf16>, vector<32x512xf32> -> vector<32x512xf32>
    %105 = vector.extract_strided_slice %104 {offsets = [0, 0], sizes = [16, 512], strides = [1, 1]} : vector<32x512xf32> to vector<16x512xf32>
    %c48_57 = arith.constant 48 : index
    %c0_58 = arith.constant 0 : index
    %106 = vector.load %arg8[%c48_57, %c0_58] : memref<64x1xf32, #tpu.memory_space<vmem>>, vector<16x1xf32>
    %107 = vector.broadcast %106 : vector<16x1xf32> to vector<16x512xf32>
    %108 = arith.addf %105, %107 : vector<16x512xf32>
    %109 = vector.extract_strided_slice %104 {offsets = [16, 0], sizes = [16, 512], strides = [1, 1]} : vector<32x512xf32> to vector<16x512xf32>
    %c1_i32_59 = arith.constant 1 : i32
    %110 = tpu.dynamic_rotate %109 by %c1_i32_59 dim 1 : vector<16x512xf32>, i32 -> vector<16x512xf32>
    %111 = vector.broadcast %0 : vector<1x512xf32> to vector<16x512xf32>
    %112 = arith.mulf %110, %111 : vector<16x512xf32>
    %113 = arith.addf %109, %112 : vector<16x512xf32>
    %c511_i32_60 = arith.constant 511 : i32
    %114 = tpu.dynamic_rotate %109 by %c511_i32_60 dim 1 : vector<16x512xf32>, i32 -> vector<16x512xf32>
    %115 = vector.broadcast %1 : vector<1x512xf32> to vector<16x512xf32>
    %116 = arith.mulf %114, %115 : vector<16x512xf32>
    %117 = arith.addf %113, %116 : vector<16x512xf32>
    %c16_i32_61 = arith.constant 16 : i32
    %118 = tpu.dynamic_rotate %117 by %c16_i32_61 dim 1 : vector<16x512xf32>, i32 -> vector<16x512xf32>
    %119 = vector.broadcast %2 : vector<1x512xf32> to vector<16x512xf32>
    %120 = arith.mulf %118, %119 : vector<16x512xf32>
    %121 = arith.addf %117, %120 : vector<16x512xf32>
    %c496_i32_62 = arith.constant 496 : i32
    %122 = tpu.dynamic_rotate %117 by %c496_i32_62 dim 1 : vector<16x512xf32>, i32 -> vector<16x512xf32>
    %123 = vector.broadcast %3 : vector<1x512xf32> to vector<16x512xf32>
    %124 = arith.mulf %122, %123 : vector<16x512xf32>
    %125 = arith.addf %121, %124 : vector<16x512xf32>
    %cst_63 = arith.constant 0.111111112 : f32
    %126 = vector.broadcast %cst_63 : f32 to vector<16x512xf32>
    %127 = arith.mulf %125, %126 : vector<16x512xf32>
    %128 = arith.addf %108, %127 : vector<16x512xf32>
    %c48_64 = arith.constant 48 : index
    %c0_65 = arith.constant 0 : index
    %129 = vector.load %arg10[%c48_64, %c0_65] : memref<64x512xf32, #tpu.memory_space<vmem>>, vector<16x512xf32>
    tpu.vector_store %arg10[%c48_64, %c0_65], %128 {strides = array<i32>} : memref<64x512xf32, #tpu.memory_space<vmem>>, vector<16x512xf32>,
    return
  }
  func.func @transform_0(%arg0: i32) -> (i32, i32) {
    %c0_i32 = arith.constant 0 : i32
    %c0_i32_0 = arith.constant 0 : i32
    return %c0_i32, %arg0 : i32, i32
  }
  func.func @transform_1(%arg0: i32) -> (i32, i32) {
    %c0_i32 = arith.constant 0 : i32
    %c0_i32_0 = arith.constant 0 : i32
    %c0_i32_1 = arith.constant 0 : i32
    return %c0_i32, %c0_i32_0 : i32, i32
  }
  func.func @transform_2(%arg0: i32) -> (i32, i32) {
    %c0_i32 = arith.constant 0 : i32
    %c0_i32_0 = arith.constant 0 : i32
    %c0_i32_1 = arith.constant 0 : i32
    return %c0_i32, %c0_i32_0 : i32, i32
  }
  func.func @transform_3(%arg0: i32) -> (i32, i32) {
    %c0_i32 = arith.constant 0 : i32
    %c0_i32_0 = arith.constant 0 : i32
    %c0_i32_1 = arith.constant 0 : i32
    return %c0_i32, %c0_i32_0 : i32, i32
  }
  func.func @transform_4(%arg0: i32) -> (i32, i32) {
    %c0_i32 = arith.constant 0 : i32
    %c0_i32_0 = arith.constant 0 : i32
    %c0_i32_1 = arith.constant 0 : i32
    return %c0_i32, %c0_i32_0 : i32, i32
  }
  func.func @transform_5(%arg0: i32) -> (i32, i32) {
    %c0_i32 = arith.constant 0 : i32
    %c0_i32_0 = arith.constant 0 : i32
    %c0_i32_1 = arith.constant 0 : i32
    return %c0_i32, %c0_i32_0 : i32, i32
  }
  func.func @transform_6(%arg0: i32) -> (i32, i32) {
    %c0_i32 = arith.constant 0 : i32
    %c0_i32_0 = arith.constant 0 : i32
    %c0_i32_1 = arith.constant 0 : i32
    return %c0_i32, %c0_i32_0 : i32, i32
  }
  func.func @transform_7(%arg0: i32) -> (i32, i32) {
    %c0_i32 = arith.constant 0 : i32
    %c0_i32_0 = arith.constant 0 : i32
    %c0_i32_1 = arith.constant 0 : i32
    return %c0_i32, %c0_i32_0 : i32, i32
  }
  func.func @transform_8(%arg0: i32) -> (i32, i32) {
    %c0_i32 = arith.constant 0 : i32
    %c0_i32_0 = arith.constant 0 : i32
    %c0_i32_1 = arith.constant 0 : i32
    return %c0_i32, %c0_i32_0 : i32, i32
  }
  func.func @transform_9(%arg0: i32) -> (i32, i32) {
    %c0_i32 = arith.constant 0 : i32
    %c0_i32_0 = arith.constant 0 : i32
    return %c0_i32, %arg0 : i32, i32
  }
}

</mosaic_0001>

<llo_original>
// kernel: cell_forward.1
$region0: #{cell_forward.1}
  #allocation0 [shape = 'u32[]', space=smem, size = 0x4, offset = 0x4, fixed_abs, tag = 'smem constant byte address 0x4 - core index']
  #allocation1 [shape = 'u32[144,128]{1,0:T(1,128)}', space=vmem, size = 0x12000, scoped, tag = 'internal scratch']
  #allocation2 [shape = 'bf16[80,512]{1,0:T(16,128)(2,1)}', space=vmem, size = 0x14000, scoped, tag = 'scratch operand']
  %s0 = inlined_call_operand.vmem [shape: bf16[16,512], index: 0, kind: input, shape index: {}]
  %s1 = inlined_call_operand.vmem [shape: bf16[32,16], index: 1, kind: input, shape index: {}]
  %s2 = inlined_call_operand.vmem [shape: f32[32,1], index: 2, kind: input, shape index: {}]
  %s3 = inlined_call_operand.vmem [shape: bf16[32,32], index: 3, kind: input, shape index: {}]
  %s4 = inlined_call_operand.vmem [shape: bf16[32,48], index: 4, kind: input, shape index: {}]
  %s5 = inlined_call_operand.vmem [shape: bf16[32,64], index: 5, kind: input, shape index: {}]
  %s6 = inlined_call_operand.vmem [shape: bf16[32,80], index: 6, kind: input, shape index: {}]
  %s7 = inlined_call_operand.vmem [shape: f32[64,1], index: 7, kind: input, shape index: {}]
  %s8 = inlined_call_operand.vmem [shape: f32[4,512], index: 8, kind: input, shape index: {}]
  %s9 = inlined_call_operand.vmem [shape: f32[64,512], index: 9, kind: output, shape index: {}]
  %s10 = sld [smem:[#allocation0]]
  $region46: #{cell_forward.1} parent=0
    _
  %s12 = ssub.s32 1, %s10
  %s13 = scalar_select 0, %s12, %s10
  // Predicated region
  $region2: #{cell_forward.1} parent=0 // pred_check
    _
  $region3: #{cell_forward.1} parent=0 // pred_check_branch
    %15 = sbr.rel (0) target = $region5
  $region4: #{cell_forward.1} parent=0 // pred_region
    _
  $region5: #{cell_forward.1} parent=0 // pred_fallthru
    _
  // Predicated region
  $region6: #{cell_forward.1} parent=0 // pred_check
    _
  $region7: #{cell_forward.1} parent=0 // pred_check_branch
    %17 = sbr.rel (0) target = $region9
  $region8: #{cell_forward.1} parent=0 // pred_region
    _
  $region9: #{cell_forward.1} parent=0 // pred_fallthru
    _
  // Predicated region
  $region10: #{cell_forward.1} parent=0 // pred_check
    _
  $region11: #{cell_forward.1} parent=0 // pred_check_branch
    %19 = sbr.rel (0) target = $region13
  $region12: #{cell_forward.1} parent=0 // pred_region
    _
  $region13: #{cell_forward.1} parent=0 // pred_fallthru
    _
  // Predicated region
  $region14: #{cell_forward.1} parent=0 // pred_check
    _
  $region15: #{cell_forward.1} parent=0 // pred_check_branch
    %21 = sbr.rel (0) target = $region17
  $region16: #{cell_forward.1} parent=0 // pred_region
    _
  $region17: #{cell_forward.1} parent=0 // pred_fallthru
    _
  // Predicated region
  $region18: #{cell_forward.1} parent=0 // pred_check
    _
  $region19: #{cell_forward.1} parent=0 // pred_check_branch
    %23 = sbr.rel (0) target = $region21
  $region20: #{cell_forward.1} parent=0 // pred_region
    _
  $region21: #{cell_forward.1} parent=0 // pred_fallthru
    _
  // Predicated region
  $region22: #{cell_forward.1} parent=0 // pred_check
    _
  $region23: #{cell_forward.1} parent=0 // pred_check_branch
    %25 = sbr.rel (0) target = $region25
  $region24: #{cell_forward.1} parent=0 // pred_region
    _
  $region25: #{cell_forward.1} parent=0 // pred_fallthru
    _
  // Predicated region
  $region26: #{cell_forward.1} parent=0 // pred_check
    _
  $region27: #{cell_forward.1} parent=0 // pred_check_branch
    %27 = sbr.rel (0) target = $region29
  $region28: #{cell_forward.1} parent=0 // pred_region
    _
  $region29: #{cell_forward.1} parent=0 // pred_fallthru
    _
  // Predicated region
  $region30: #{cell_forward.1} parent=0 // pred_check
    _
  $region31: #{cell_forward.1} parent=0 // pred_check_branch
    %29 = sbr.rel (0) target = $region33
  $region32: #{cell_forward.1} parent=0 // pred_region
    _
  $region33: #{cell_forward.1} parent=0 // pred_fallthru
    _
  // Predicated region
  $region34: #{cell_forward.1} parent=0 // pred_check
    _
  $region35: #{cell_forward.1} parent=0 // pred_check_branch
    %31 = sbr.rel (0) target = $region37
  $region36: #{cell_forward.1} parent=0 // pred_region
    _
  $region37: #{cell_forward.1} parent=0 // pred_fallthru
    _
  %v33 = vld [vmem:[%s8] ss:$4 sm:$0xf]
  %s34 = scalar_lea.vmem %s8, 1
  %v35 = vld [vmem:[%s34] ss:$4 sm:$0xf]
  %s36 = scalar_lea.vmem %s8, 2
  %v37 = vld [vmem:[%s36] ss:$4 sm:$0xf]
  %s38 = scalar_lea.vmem %s8, 3
  %v39 = vld [vmem:[%s38] ss:$4 sm:$0xf]
  %v40 = vld [vmem:[%s1] sm:$0xf]
  %v41 = vld [vmem:[%s1 + $0x4] sm:$0xf]
  %v42 = vld [vmem:[%s1 + $0x8] sm:$0xf]
  %v43 = vld [vmem:[%s1 + $0xc] sm:$0xf]
  %v44 = vld [vmem:[%s0] sm:$0xff]
  %v45 = vld [vmem:[%s0 + $0x8] sm:$0xff]
  %v46 = vld [vmem:[%s0 + $0x10] sm:$0xff]
  %v47 = vld [vmem:[%s0 + $0x18] sm:$0xff]
  %v48 = vld [vmem:[%s2] sm:$0xff]
  %v49 = vld [vmem:[%s2 + $0x8] sm:$0xff]
  %v50 = vld [vmem:[%s2 + $0x10] sm:$0xff]
  %v51 = vld [vmem:[%s2 + $0x18] sm:$0xff]
  %53 = vset.pattern.permute.xlu0 0
  %54 = vperm.xlu0 %53, %v48
  %v55 = vpop.permute.xlu0 %54
  %58 = vset.pattern.permute.xlu0 0
  %59 = vperm.xlu0 %58, %v49
  %v60 = vpop.permute.xlu0 %59
  %63 = vset.pattern.permute.xlu0 0
  %64 = vperm.xlu0 %63, %v50
  %v65 = vpop.permute.xlu0 %64
  %68 = vset.pattern.permute.xlu0 0
  %69 = vperm.xlu0 %68, %v51
  %v70 = vpop.permute.xlu0 %69
  %v76 = vunpack.c.l.b16 %v40
  %v77 = vunpack.c.l.b16 %v41
  %v78 = vunpack.c.l.b16 %v42
  %v79 = vunpack.c.l.b16 %v43
  %v80 = vpack.c.b16 %v77, %v76
  %v81 = vpack.c.b16 %v79, %v78
  %v86 = vunpack.c.l.b16 %v44
  %v87 = vunpack.c.h.b16 %v44
  %v88 = vunpack.c.l.b16 %v45
  %v89 = vunpack.c.h.b16 %v45
  %v90 = vunpack.c.l.b16 %v46
  %v91 = vunpack.c.h.b16 %v46
  %v92 = vunpack.c.l.b16 %v47
  %v93 = vunpack.c.h.b16 %v47
  %v94 = vpack.c.b16 %v90, %v86
  %v95 = vpack.c.b16 %v91, %v87
  %v96 = vpack.c.b16 %v92, %v88
  %v97 = vpack.c.b16 %v93, %v89
  %vm102 = vcmask 130048
  %v104 = vsel %vm102, %v80, 0
  %v107 = vsel %vm102, %v81, 0
  %109 = vmatprep.subr.bf16.mxu0 %v95
  %110 = vmatpush1.bf16.msra.mxu0 %v94
  %111 = vmatprep.subr.bf16.mxu0 0
  %112 = vmatpush1.bf16.msra.mxu0 0
  %113 = vmatprep.subr.bf16.mxu0 0
  %114 = vmatpush1.bf16.msra.mxu0 0
  %115 = vmatprep.subr.bf16.mxu0 0
  %116 = vmatpush1.bf16.msra.mxu0 0
  %117 = vmatprep.subr.bf16.mxu0 0
  %118 = vmatpush1.bf16.msra.mxu0 0
  %119 = vmatprep.subr.bf16.mxu0 0
  %120 = vmatpush1.bf16.msra.mxu0 0
  %121 = vmatprep.subr.bf16.mxu0 0
  %122 = vmatpush1.bf16.msra.mxu0 0
  %123 = vmatprep.subr.bf16.mxu0 0
  %124 = vmatpush1.bf16.msra.mxu0 0
  %125 = vmatprep.subr.bf16.mxu0 0
  %126 = vmatpush1.bf16.msra.mxu0 0
  %127 = vmatprep.subr.bf16.mxu0 0
  %128 = vmatpush1.bf16.msra.mxu0 0
  %129 = vmatprep.subr.bf16.mxu0 0
  %130 = vmatpush1.bf16.msra.mxu0 0
  %131 = vmatprep.subr.bf16.mxu0 0
  %132 = vmatpush1.bf16.msra.mxu0 0
  %133 = vmatprep.subr.bf16.mxu0 0
  %134 = vmatpush1.bf16.msra.mxu0 0
  %135 = vmatprep.subr.bf16.mxu0 0
  %136 = vmatpush1.bf16.msra.mxu0 0
  %137 = vmatprep.subr.bf16.mxu0 0
  %138 = vmatpush1.bf16.msra.mxu0 0
  %139 = vmatprep.subr.bf16.mxu0 0
  %140 = vmatpush1.bf16.msra.mxu0 0
  %141 = vmatprep.mubr.bf16.mxu0 0
  %142 = vmatmul.mubr.bf16.gmra.mrb[0].mxu0 %v104
  %v143 = vpop.f32.mrb[0].mxu0
  %v144 = vadd.f32 %v55, %v143
  %v145 = vpop.f32.mrb[0].mxu0
  %v146 = vadd.f32 %v55, %v145
  %v147 = vpop.f32.mrb[0].mxu0
  %v148 = vadd.f32 %v60, %v147
  %v149 = vpop.f32.mrb[0].mxu0
  %v150 = vadd.f32 %v60, %v149
  %151 = vmatprep.mubr.bf16.mxu0 0
  %152 = vmatmul.mubr.bf16.gmra.mrb[0].mxu0 %v107
  %v153 = vpop.f32.mrb[0].mxu0
  %v154 = vadd.f32 %v65, %v153
  %v155 = vpop.f32.mrb[0].mxu0
  %v156 = vadd.f32 %v65, %v155
  %v157 = vpop.f32.mrb[0].mxu0
  %v158 = vadd.f32 %v70, %v157
  %v159 = vpop.f32.mrb[0].mxu0
  %v160 = vadd.f32 %v70, %v159
  %161 = vdwg.mxu0
  %162 = vmatprep.subr.bf16.mxu0 %v97
  %163 = vmatpush1.bf16.msra.mxu0 %v96
  %164 = vmatprep.subr.bf16.mxu0 0
  %165 = vmatpush1.bf16.msra.mxu0 0
  %166 = vmatprep.subr.bf16.mxu0 0
  %167 = vmatpush1.bf16.msra.mxu0 0
  %168 = vmatprep.subr.bf16.mxu0 0
  %169 = vmatpush1.bf16.msra.mxu0 0
  %170 = vmatprep.subr.bf16.mxu0 0
  %171 = vmatpush1.bf16.msra.mxu0 0
  %172 = vmatprep.subr.bf16.mxu0 0
  %173 = vmatpush1.bf16.msra.mxu0 0
  %174 = vmatprep.subr.bf16.mxu0 0
  %175 = vmatpush1.bf16.msra.mxu0 0
  %176 = vmatprep.subr.bf16.mxu0 0
  %177 = vmatpush1.bf16.msra.mxu0 0
  %178 = vmatprep.subr.bf16.mxu0 0
  %179 = vmatpush1.bf16.msra.mxu0 0
  %180 = vmatprep.subr.bf16.mxu0 0
  %181 = vmatpush1.bf16.msra.mxu0 0
  %182 = vmatprep.subr.bf16.mxu0 0
  %183 = vmatpush1.bf16.msra.mxu0 0
  %184 = vmatprep.subr.bf16.mxu0 0
  %185 = vmatpush1.bf16.msra.mxu0 0
  %186 = vmatprep.subr.bf16.mxu0 0
  %187 = vmatpush1.bf16.msra.mxu0 0
  %188 = vmatprep.subr.bf16.mxu0 0
  %189 = vmatpush1.bf16.msra.mxu0 0
  %190 = vmatprep.subr.bf16.mxu0 0
  %191 = vmatpush1.bf16.msra.mxu0 0
  %192 = vmatprep.subr.bf16.mxu0 0
  %193 = vmatpush1.bf16.msra.mxu0 0
  %194 = vmatprep.mubr.bf16.mxu0 0
  %195 = vmatmul.mubr.bf16.gmra.mrb[0].mxu0 %v104
  %v196 = vpop.f32.mrb[0].mxu0
  %v197 = vadd.f32 %v55, %v196
  %v198 = vpop.f32.mrb[0].mxu0
  %v199 = vadd.f32 %v55, %v198
  %v200 = vpop.f32.mrb[0].mxu0
  %v201 = vadd.f32 %v60, %v200
  %v202 = vpop.f32.mrb[0].mxu0
  %v203 = vadd.f32 %v60, %v202
  %204 = vmatprep.mubr.bf16.mxu0 0
  %205 = vmatmul.mubr.bf16.gmra.mrb[0].mxu0 %v107
  %v206 = vpop.f32.mrb[0].mxu0
  %v207 = vadd.f32 %v65, %v206
  %v208 = vpop.f32.mrb[0].mxu0
  %v209 = vadd.f32 %v65, %v208
  %v210 = vpop.f32.mrb[0].mxu0
  %v211 = vadd.f32 %v70, %v210
  %v212 = vpop.f32.mrb[0].mxu0
  %v213 = vadd.f32 %v70, %v212
  %214 = vdwg.mxu0
  %v215 = vpack.c.bf16 %v148, %v144
  %v216 = vpack.c.bf16 %v150, %v146
  %v217 = vpack.c.bf16 %v201, %v197
  %v218 = vpack.c.bf16 %v203, %v199
  %v219 = vpack.c.bf16 %v158, %v154
  %v220 = vpack.c.bf16 %v160, %v156
  %v221 = vpack.c.bf16 %v211, %v207
  %v222 = vpack.c.bf16 %v213, %v209
  %223 = vst [vmem:[#allocation2] sm:$0xff] %v215
  %224 = vst [vmem:[#allocation2 + $0x8] sm:$0xff] %v216
  %225 = vst [vmem:[#allocation2 + $0x10] sm:$0xff] %v217
  %226 = vst [vmem:[#allocation2 + $0x18] sm:$0xff] %v218
  %227 = vst [vmem:[#allocation2 + $0x20] sm:$0xff] %v219
  %228 = vst [vmem:[#allocation2 + $0x28] sm:$0xff] %v220
  %229 = vst [vmem:[#allocation2 + $0x30] sm:$0xff] %v221
  %230 = vst [vmem:[#allocation2 + $0x38] sm:$0xff] %v222
  %v231 = vld [vmem:[#allocation2] sm:$0xff]
  %v232 = vld [vmem:[#allocation2 + $0x8] sm:$0xff]
  %v233 = vld [vmem:[#allocation2 + $0x10] sm:$0xff]
  %v234 = vld [vmem:[#allocation2 + $0x18] sm:$0xff]
  %v235 = vld [vmem:[#allocation2 + $0x20] sm:$0xff]
  %v236 = vld [vmem:[#allocation2 + $0x28] sm:$0xff]
  %v237 = vld [vmem:[#allocation2 + $0x30] sm:$0xff]
  %v238 = vld [vmem:[#allocation2 + $0x38] sm:$0xff]
  %v239 = vld [vmem:[%s3] sm:$0xf]
  %v240 = vld [vmem:[%s3 + $0x4] sm:$0xf]
  %v241 = vld [vmem:[%s3 + $0x8] sm:$0xf]
  %v242 = vld [vmem:[%s3 + $0xc] sm:$0xf]
  %v247 = vunpack.c.l.b16 %v239
  %v248 = vunpack.c.l.b16 %v240
  %v249 = vunpack.c.l.b16 %v241
  %v250 = vunpack.c.l.b16 %v242
  %v251 = vpack.c.b16 %v248, %v247
  %v252 = vpack.c.b16 %v250, %v249
  %vm253 = vcmask 261120
  %v255 = vsel %vm253, %v251, 0
  %v258 = vsel %vm253, %v252, 0
  %260 = vmatprep.subr.bf16.mxu0 %v232
  %261 = vmatpush1.bf16.msra.mxu0 %v231
  %262 = vmatprep.subr.bf16.mxu0 %v236
  %263 = vmatpush1.bf16.msra.mxu0 %v235
  %264 = vmatprep.subr.bf16.mxu0 0
  %265 = vmatpush1.bf16.msra.mxu0 0
  %266 = vmatprep.subr.bf16.mxu0 0
  %267 = vmatpush1.bf16.msra.mxu0 0
  %268 = vmatprep.subr.bf16.mxu0 0
  %269 = vmatpush1.bf16.msra.mxu0 0
  %270 = vmatprep.subr.bf16.mxu0 0
  %271 = vmatpush1.bf16.msra.mxu0 0
  %272 = vmatprep.subr.bf16.mxu0 0
  %273 = vmatpush1.bf16.msra.mxu0 0
  %274 = vmatprep.subr.bf16.mxu0 0
  %275 = vmatpush1.bf16.msra.mxu0 0
  %276 = vmatprep.subr.bf16.mxu0 0
  %277 = vmatpush1.bf16.msra.mxu0 0
  %278 = vmatprep.subr.bf16.mxu0 0
  %279 = vmatpush1.bf16.msra.mxu0 0
  %280 = vmatprep.subr.bf16.mxu0 0
  %281 = vmatpush1.bf16.msra.mxu0 0
  %282 = vmatprep.subr.bf16.mxu0 0
  %283 = vmatpush1.bf16.msra.mxu0 0
  %284 = vmatprep.subr.bf16.mxu0 0
  %285 = vmatpush1.bf16.msra.mxu0 0
  %286 = vmatprep.subr.bf16.mxu0 0
  %287 = vmatpush1.bf16.msra.mxu0 0
  %288 = vmatprep.subr.bf16.mxu0 0
  %289 = vmatpush1.bf16.msra.mxu0 0
  %290 = vmatprep.subr.bf16.mxu0 0
  %291 = vmatpush1.bf16.msra.mxu0 0
  %292 = vmatprep.mubr.bf16.mxu0 0
  %293 = vmatmul.mubr.bf16.gmra.mrb[0].mxu0 %v255
  %v294 = vpop.f32.mrb[0].mxu0
  %v295 = vadd.f32 0.0, %v294
  %v296 = vpop.f32.mrb[0].mxu0
  %v297 = vadd.f32 0.0, %v296
  %v298 = vpop.f32.mrb[0].mxu0
  %v299 = vadd.f32 0.0, %v298
  %v300 = vpop.f32.mrb[0].mxu0
  %v301 = vadd.f32 0.0, %v300
  %302 = vmatprep.mubr.bf16.mxu0 0
  %303 = vmatmul.mubr.bf16.gmra.mrb[0].mxu0 %v258
  %v304 = vpop.f32.mrb[0].mxu0
  %v305 = vadd.f32 0.0, %v304
  %v306 = vpop.f32.mrb[0].mxu0
  %v307 = vadd.f32 0.0, %v306
  %v308 = vpop.f32.mrb[0].mxu0
  %v309 = vadd.f32 0.0, %v308
  %v310 = vpop.f32.mrb[0].mxu0
  %v311 = vadd.f32 0.0, %v310
  %312 = vdwg.mxu0
  %313 = vmatprep.subr.bf16.mxu0 %v234
  %314 = vmatpush1.bf16.msra.mxu0 %v233
  %315 = vmatprep.subr.bf16.mxu0 %v238
  %316 = vmatpush1.bf16.msra.mxu0 %v237
  %317 = vmatprep.subr.bf16.mxu0 0
  %318 = vmatpush1.bf16.msra.mxu0 0
  %319 = vmatprep.subr.bf16.mxu0 0
  %320 = vmatpush1.bf16.msra.mxu0 0
  %321 = vmatprep.subr.bf16.mxu0 0
  %322 = vmatpush1.bf16.msra.mxu0 0
  %323 = vmatprep.subr.bf16.mxu0 0
  %324 = vmatpush1.bf16.msra.mxu0 0
  %325 = vmatprep.subr.bf16.mxu0 0
  %326 = vmatpush1.bf16.msra.mxu0 0
  %327 = vmatprep.subr.bf16.mxu0 0
  %328 = vmatpush1.bf16.msra.mxu0 0
  %329 = vmatprep.subr.bf16.mxu0 0
  %330 = vmatpush1.bf16.msra.mxu0 0
  %331 = vmatprep.subr.bf16.mxu0 0
  %332 = vmatpush1.bf16.msra.mxu0 0
  %333 = vmatprep.subr.bf16.mxu0 0
  %334 = vmatpush1.bf16.msra.mxu0 0
  %335 = vmatprep.subr.bf16.mxu0 0
  %336 = vmatpush1.bf16.msra.mxu0 0
  %337 = vmatprep.subr.bf16.mxu0 0
  %338 = vmatpush1.bf16.msra.mxu0 0
  %339 = vmatprep.subr.bf16.mxu0 0
  %340 = vmatpush1.bf16.msra.mxu0 0
  %341 = vmatprep.subr.bf16.mxu0 0
  %342 = vmatpush1.bf16.msra.mxu0 0
  %343 = vmatprep.subr.bf16.mxu0 0
  %344 = vmatpush1.bf16.msra.mxu0 0
  %345 = vmatprep.mubr.bf16.mxu0 0
  %346 = vmatmul.mubr.bf16.gmra.mrb[0].mxu0 %v255
  %v347 = vpop.f32.mrb[0].mxu0
  %v348 = vadd.f32 0.0, %v347
  %v349 = vpop.f32.mrb[0].mxu0
  %v350 = vadd.f32 0.0, %v349
  %v351 = vpop.f32.mrb[0].mxu0
  %v352 = vadd.f32 0.0, %v351
  %v353 = vpop.f32.mrb[0].mxu0
  %v354 = vadd.f32 0.0, %v353
  %355 = vmatprep.mubr.bf16.mxu0 0
  %356 = vmatmul.mubr.bf16.gmra.mrb[0].mxu0 %v258
  %v357 = vpop.f32.mrb[0].mxu0
  %v358 = vadd.f32 0.0, %v357
  %v359 = vpop.f32.mrb[0].mxu0
  %v360 = vadd.f32 0.0, %v359
  %v361 = vpop.f32.mrb[0].mxu0
  %v362 = vadd.f32 0.0, %v361
  %v363 = vpop.f32.mrb[0].mxu0
  %v364 = vadd.f32 0.0, %v363
  %365 = vdwg.mxu0
  %v366 = vld [vmem:[%s7] sm:$0xff]
  %v367 = vld [vmem:[%s7 + $0x8] sm:$0xff]
  %369 = vset.pattern.permute.xlu0 0
  %370 = vperm.xlu0 %369, %v366
  %v371 = vpop.permute.xlu0 %370
  %374 = vset.pattern.permute.xlu0 0
  %375 = vperm.xlu0 %374, %v367
  %v376 = vpop.permute.xlu0 %375
  %v378 = vadd.f32 %v295, %v371
  %v379 = vadd.f32 %v297, %v371
  %v380 = vadd.f32 %v348, %v371
  %v381 = vadd.f32 %v350, %v371
  %v382 = vadd.f32 %v299, %v376
  %v383 = vadd.f32 %v301, %v376
  %v384 = vadd.f32 %v352, %v376
  %v385 = vadd.f32 %v354, %v376
  %386 = vrot.lane.b32.xlu0 %v305, 1
  %v387 = vpop.permute.xlu0 %386
  %388 = vrot.lane.b32.xlu0 %v309, 1
  %v389 = vpop.permute.xlu0 %388
  %390 = vrot.lane.b32.xlu0 %v307, 1
  %v391 = vpop.permute.xlu0 %390
  %392 = vrot.lane.b32.xlu0 %v311, 1
  %v393 = vpop.permute.xlu0 %392
  %394 = vrot.lane.b32.xlu0 %v358, 1
  %v395 = vpop.permute.xlu0 %394
  %396 = vrot.lane.b32.xlu0 %v362, 1
  %v397 = vpop.permute.xlu0 %396
  %398 = vrot.lane.b32.xlu0 %v360, 1
  %v399 = vpop.permute.xlu0 %398
  %400 = vrot.lane.b32.xlu0 %v364, 1
  %v401 = vpop.permute.xlu0 %400
  %v402 = vlaneseq
  %v403 = vand.u32 %v402, 127
  %vm404 = vcmp.lt.s32.totalorder %v403, 1
  %v405 = vsel %vm404, %v395, %v399
  %v406 = vsel %vm404, %v397, %v401
  %v407 = vsel %vm404, %v391, %v395
  %v408 = vsel %vm404, %v393, %v397
  %v409 = vsel %vm404, %v387, %v391
  %v410 = vsel %vm404, %v389, %v393
  %v411 = vsel %vm404, %v399, %v387
  %v412 = vsel %vm404, %v401, %v389
  %v414 = vlaneseq
  %v415 = vshrl.u32 %v414, 7
  %v416 = vsub.s32 0, %v415
  %v417 = vrot.slane %v33, %v416
  %v418 = vlaneseq
  %v419 = vshrl.u32 %v418, 7
  %v420 = vsub.s32 1, %v419
  %v421 = vrot.slane %v33, %v420
  %v422 = vlaneseq
  %v423 = vshrl.u32 %v422, 7
  %v424 = vsub.s32 2, %v423
  %v425 = vrot.slane %v33, %v424
  %v426 = vlaneseq
  %v427 = vshrl.u32 %v426, 7
  %v428 = vsub.s32 3, %v427
  %v429 = vrot.slane %v33, %v428
  %v434 = vmul.f32 %v411, %v417
  %v435 = vmul.f32 %v409, %v421
  %v436 = vmul.f32 %v407, %v425
  %v437 = vmul.f32 %v405, %v429
  %v438 = vmul.f32 %v412, %v417
  %v439 = vmul.f32 %v410, %v421
  %v440 = vmul.f32 %v408, %v425
  %v441 = vmul.f32 %v406, %v429
  %v442 = vadd.f32 %v305, %v434
  %v443 = vadd.f32 %v307, %v435
  %v444 = vadd.f32 %v358, %v436
  %v445 = vadd.f32 %v360, %v437
  %v446 = vadd.f32 %v309, %v438
  %v447 = vadd.f32 %v311, %v439
  %v448 = vadd.f32 %v362, %v440
  %v449 = vadd.f32 %v364, %v441
  %450 = vrot.lane.b32.xlu0 %v305, 127
  %v451 = vpop.permute.xlu0 %450
  %452 = vrot.lane.b32.xlu0 %v309, 127
  %v453 = vpop.permute.xlu0 %452
  %454 = vrot.lane.b32.xlu0 %v307, 127
  %v455 = vpop.permute.xlu0 %454
  %456 = vrot.lane.b32.xlu0 %v311, 127
  %v457 = vpop.permute.xlu0 %456
  %458 = vrot.lane.b32.xlu0 %v358, 127
  %v459 = vpop.permute.xlu0 %458
  %460 = vrot.lane.b32.xlu0 %v362, 127
  %v461 = vpop.permute.xlu0 %460
  %462 = vrot.lane.b32.xlu0 %v360, 127
  %v463 = vpop.permute.xlu0 %462
  %464 = vrot.lane.b32.xlu0 %v364, 127
  %v465 = vpop.permute.xlu0 %464
  %vm466 = vcmp.lt.s32.totalorder %v403, 127
  %v467 = vsel %vm466, %v459, %v463
  %v468 = vsel %vm466, %v461, %v465
  %v469 = vsel %vm466, %v455, %v459
  %v470 = vsel %vm466, %v457, %v461
  %v471 = vsel %vm466, %v451, %v455
  %v472 = vsel %vm466, %v453, %v457
  %v473 = vsel %vm466, %v463, %v451
  %v474 = vsel %vm466, %v465, %v453
  %v476 = vlaneseq
  %v477 = vshrl.u32 %v476, 7
  %v478 = vsub.s32 0, %v477
  %v479 = vrot.slane %v35, %v478
  %v480 = vlaneseq
  %v481 = vshrl.u32 %v480, 7
  %v482 = vsub.s32 1, %v481
  %v483 = vrot.slane %v35, %v482
  %v484 = vlaneseq
  %v485 = vshrl.u32 %v484, 7
  %v486 = vsub.s32 2, %v485
  %v487 = vrot.slane %v35, %v486
  %v488 = vlaneseq
  %v489 = vshrl.u32 %v488, 7
  %v490 = vsub.s32 3, %v489
  %v491 = vrot.slane %v35, %v490
  %v496 = vmul.f32 %v471, %v479
  %v497 = vmul.f32 %v469, %v483
  %v498 = vmul.f32 %v467, %v487
  %v499 = vmul.f32 %v473, %v491
  %v500 = vmul.f32 %v472, %v479
  %v501 = vmul.f32 %v470, %v483
  %v502 = vmul.f32 %v468, %v487
  %v503 = vmul.f32 %v474, %v491
  %v504 = vadd.f32 %v442, %v496
  %v505 = vadd.f32 %v443, %v497
  %v506 = vadd.f32 %v444, %v498
  %v507 = vadd.f32 %v445, %v499
  %v508 = vadd.f32 %v446, %v500
  %v509 = vadd.f32 %v447, %v501
  %v510 = vadd.f32 %v448, %v502
  %v511 = vadd.f32 %v449, %v503
  %512 = vrot.lane.b32.xlu0 %v504, 16
  %v513 = vpop.permute.xlu0 %512
  %514 = vrot.lane.b32.xlu0 %v508, 16
  %v515 = vpop.permute.xlu0 %514
  %516 = vrot.lane.b32.xlu0 %v505, 16
  %v517 = vpop.permute.xlu0 %516
  %518 = vrot.lane.b32.xlu0 %v509, 16
  %v519 = vpop.permute.xlu0 %518
  %520 = vrot.lane.b32.xlu0 %v506, 16
  %v521 = vpop.permute.xlu0 %520
  %522 = vrot.lane.b32.xlu0 %v510, 16
  %v523 = vpop.permute.xlu0 %522
  %524 = vrot.lane.b32.xlu0 %v507, 16
  %v525 = vpop.permute.xlu0 %524
  %526 = vrot.lane.b32.xlu0 %v511, 16
  %v527 = vpop.permute.xlu0 %526
  %vm528 = vcmp.lt.s32.totalorder %v403, 16
  %v529 = vsel %vm528, %v521, %v525
  %v530 = vsel %vm528, %v523, %v527
  %v531 = vsel %vm528, %v517, %v521
  %v532 = vsel %vm528, %v519, %v523
  %v533 = vsel %vm528, %v513, %v517
  %v534 = vsel %vm528, %v515, %v519
  %v535 = vsel %vm528, %v525, %v513
  %v536 = vsel %vm528, %v527, %v515
  %v538 = vlaneseq
  %v539 = vshrl.u32 %v538, 7
  %v540 = vsub.s32 0, %v539
  %v541 = vrot.slane %v37, %v540
  %v542 = vlaneseq
  %v543 = vshrl.u32 %v542, 7
  %v544 = vsub.s32 1, %v543
  %v545 = vrot.slane %v37, %v544
  %v546 = vlaneseq
  %v547 = vshrl.u32 %v546, 7
  %v548 = vsub.s32 2, %v547
  %v549 = vrot.slane %v37, %v548
  %v550 = vlaneseq
  %v551 = vshrl.u32 %v550, 7
  %v552 = vsub.s32 3, %v551
  %v553 = vrot.slane %v37, %v552
  %v558 = vmul.f32 %v535, %v541
  %v559 = vmul.f32 %v533, %v545
  %v560 = vmul.f32 %v531, %v549
  %v561 = vmul.f32 %v529, %v553
  %v562 = vmul.f32 %v536, %v541
  %v563 = vmul.f32 %v534, %v545
  %v564 = vmul.f32 %v532, %v549
  %v565 = vmul.f32 %v530, %v553
  %v566 = vadd.f32 %v504, %v558
  %v567 = vadd.f32 %v505, %v559
  %v568 = vadd.f32 %v506, %v560
  %v569 = vadd.f32 %v507, %v561
  %v570 = vadd.f32 %v508, %v562
  %v571 = vadd.f32 %v509, %v563
  %v572 = vadd.f32 %v510, %v564
  %v573 = vadd.f32 %v511, %v565
  %574 = vrot.lane.b32.xlu0 %v504, 112
  %v575 = vpop.permute.xlu0 %574
  %576 = vrot.lane.b32.xlu0 %v508, 112
  %v577 = vpop.permute.xlu0 %576
  %578 = vrot.lane.b32.xlu0 %v505, 112
  %v579 = vpop.permute.xlu0 %578
  %580 = vrot.lane.b32.xlu0 %v509, 112
  %v581 = vpop.permute.xlu0 %580
  %582 = vrot.lane.b32.xlu0 %v506, 112
  %v583 = vpop.permute.xlu0 %582
  %584 = vrot.lane.b32.xlu0 %v510, 112
  %v585 = vpop.permute.xlu0 %584
  %586 = vrot.lane.b32.xlu0 %v507, 112
  %v587 = vpop.permute.xlu0 %586
  %588 = vrot.lane.b32.xlu0 %v511, 112
  %v589 = vpop.permute.xlu0 %588
  %vm590 = vcmp.lt.s32.totalorder %v403, 112
  %v591 = vsel %vm590, %v583, %v587
  %v592 = vsel %vm590, %v585, %v589
  %v593 = vsel %vm590, %v579, %v583
  %v594 = vsel %vm590, %v581, %v585
  %v595 = vsel %vm590, %v575, %v579
  %v596 = vsel %vm590, %v577, %v581
  %v597 = vsel %vm590, %v587, %v575
  %v598 = vsel %vm590, %v589, %v577
  %v600 = vlaneseq
  %v601 = vshrl.u32 %v600, 7
  %v602 = vsub.s32 0, %v601
  %v603 = vrot.slane %v39, %v602
  %v604 = vlaneseq
  %v605 = vshrl.u32 %v604, 7
  %v606 = vsub.s32 1, %v605
  %v607 = vrot.slane %v39, %v606
  %v608 = vlaneseq
  %v609 = vshrl.u32 %v608, 7
  %v610 = vsub.s32 2, %v609
  %v611 = vrot.slane %v39, %v610
  %v612 = vlaneseq
  %v613 = vshrl.u32 %v612, 7
  %v614 = vsub.s32 3, %v613
  %v615 = vrot.slane %v39, %v614
  %v620 = vmul.f32 %v595, %v603
  %v621 = vmul.f32 %v593, %v607
  %v622 = vmul.f32 %v591, %v611
  %v623 = vmul.f32 %v597, %v615
  %v624 = vmul.f32 %v596, %v603
  %v625 = vmul.f32 %v594, %v607
  %v626 = vmul.f32 %v592, %v611
  %v627 = vmul.f32 %v598, %v615
  %v628 = vadd.f32 %v566, %v620
  %v629 = vadd.f32 %v567, %v621
  %v630 = vadd.f32 %v568, %v622
  %v631 = vadd.f32 %v569, %v623
  %v632 = vadd.f32 %v570, %v624
  %v633 = vadd.f32 %v571, %v625
  %v634 = vadd.f32 %v572, %v626
  %v635 = vadd.f32 %v573, %v627
  %v636 = vmul.f32 %v628, 0.11111111
  %v637 = vmul.f32 %v629, 0.11111111
  %v638 = vmul.f32 %v630, 0.11111111
  %v639 = vmul.f32 %v631, 0.11111111
  %v640 = vmul.f32 %v632, 0.11111111
  %v641 = vmul.f32 %v633, 0.11111111
  %v642 = vmul.f32 %v634, 0.11111111
  %v643 = vmul.f32 %v635, 0.11111111
  %v644 = vadd.f32 %v378, %v636
  %v645 = vadd.f32 %v379, %v637
  %v646 = vadd.f32 %v380, %v638
  %v647 = vadd.f32 %v381, %v639
  %v648 = vadd.f32 %v382, %v640
  %v649 = vadd.f32 %v383, %v641
  %v650 = vadd.f32 %v384, %v642
  %v651 = vadd.f32 %v385, %v643
  %652 = vst [vmem:[%s9] sm:$0xff] %v644
  %653 = vst [vmem:[%s9 + $0x8] sm:$0xff] %v645
  %654 = vst [vmem:[%s9 + $0x10] sm:$0xff] %v646
  %655 = vst [vmem:[%s9 + $0x18] sm:$0xff] %v647
  %656 = vst [vmem:[%s9 + $0x20] sm:$0xff] %v648
  %657 = vst [vmem:[%s9 + $0x28] sm:$0xff] %v649
  %658 = vst [vmem:[%s9 + $0x30] sm:$0xff] %v650
  %659 = vst [vmem:[%s9 + $0x38] sm:$0xff] %v651
  %v660 = vpack.c.bf16 %v648, %v644
  %v661 = vpack.c.bf16 %v649, %v645
  %v662 = vpack.c.bf16 %v650, %v646
  %v663 = vpack.c.bf16 %v651, %v647
  %664 = vst [vmem:[#allocation2 + $0x40] sm:$0xff] %v660
  %665 = vst [vmem:[#allocation2 + $0x48] sm:$0xff] %v661
  %666 = vst [vmem:[#allocation2 + $0x50] sm:$0xff] %v662
  %667 = vst [vmem:[#allocation2 + $0x58] sm:$0xff] %v663
  %v668 = vld [vmem:[#allocation2] sm:$0xff]
  %v669 = vld [vmem:[#allocation2 + $0x8] sm:$0xff]
  %v670 = vld [vmem:[#allocation2 + $0x10] sm:$0xff]
  %v671 = vld [vmem:[#allocation2 + $0x18] sm:$0xff]
  %v672 = vld [vmem:[#allocation2 + $0x20] sm:$0xff]
  %v673 = vld [vmem:[#allocation2 + $0x28] sm:$0xff]
  %v674 = vld [vmem:[#allocation2 + $0x30] sm:$0xff]
  %v675 = vld [vmem:[#allocation2 + $0x38] sm:$0xff]
  %v676 = vld [vmem:[#allocation2 + $0x40] sm:$0xff]
  %v677 = vld [vmem:[#allocation2 + $0x48] sm:$0xff]
  %v678 = vld [vmem:[#allocation2 + $0x50] sm:$0xff]
  %v679 = vld [vmem:[#allocation2 + $0x58] sm:$0xff]
  %v680 = vld [vmem:[%s4] sm:$0xf]
  %v681 = vld [vmem:[%s4 + $0x4] sm:$0xf]
  %v682 = vld [vmem:[%s4 + $0x8] sm:$0xf]
  %v683 = vld [vmem:[%s4 + $0xc] sm:$0xf]
  %v688 = vunpack.c.l.b16 %v680
  %v689 = vunpack.c.l.b16 %v681
  %v690 = vunpack.c.l.b16 %v682
  %v691 = vunpack.c.l.b16 %v683
  %v692 = vpack.c.b16 %v689, %v688
  %v693 = vpack.c.b16 %v691, %v690
  %vm694 = vcmask 392192
  %v696 = vsel %vm694, %v692, 0
  %v699 = vsel %vm694, %v693, 0
  %701 = vmatprep.subr.bf16.mxu0 %v669
  %702 = vmatpush1.bf16.msra.mxu0 %v668
  %703 = vmatprep.subr.bf16.mxu0 %v673
  %704 = vmatpush1.bf16.msra.mxu0 %v672
  %705 = vmatprep.subr.bf16.mxu0 %v677
  %706 = vmatpush1.bf16.msra.mxu0 %v676
  %707 = vmatprep.subr.bf16.mxu0 0
  %708 = vmatpush1.bf16.msra.mxu0 0
  %709 = vmatprep.subr.bf16.mxu0 0
  %710 = vmatpush1.bf16.msra.mxu0 0
  %711 = vmatprep.subr.bf16.mxu0 0
  %712 = vmatpush1.bf16.msra.mxu0 0
  %713 = vmatprep.subr.bf16.mxu0 0
  %714 = vmatpush1.bf16.msra.mxu0 0
  %715 = vmatprep.subr.bf16.mxu0 0
  %716 = vmatpush1.bf16.msra.mxu0 0
  %717 = vmatprep.subr.bf16.mxu0 0
  %718 = vmatpush1.bf16.msra.mxu0 0
  %719 = vmatprep.subr.bf16.mxu0 0
  %720 = vmatpush1.bf16.msra.mxu0 0
  %721 = vmatprep.subr.bf16.mxu0 0
  %722 = vmatpush1.bf16.msra.mxu0 0
  %723 = vmatprep.subr.bf16.mxu0 0
  %724 = vmatpush1.bf16.msra.mxu0 0
  %725 = vmatprep.subr.bf16.mxu0 0
  %726 = vmatpush1.bf16.msra.mxu0 0
  %727 = vmatprep.subr.bf16.mxu0 0
  %728 = vmatpush1.bf16.msra.mxu0 0
  %729 = vmatprep.subr.bf16.mxu0 0
  %730 = vmatpush1.bf16.msra.mxu0 0
  %731 = vmatprep.subr.bf16.mxu0 0
  %732 = vmatpush1.bf16.msra.mxu0 0
  %733 = vmatprep.mubr.bf16.mxu0 0
  %734 = vmatmul.mubr.bf16.gmra.mrb[0].mxu0 %v696
  %v735 = vpop.f32.mrb[0].mxu0
  %v736 = vadd.f32 0.0, %v735
  %v737 = vpop.f32.mrb[0].mxu0
  %v738 = vadd.f32 0.0, %v737
  %v739 = vpop.f32.mrb[0].mxu0
  %v740 = vadd.f32 0.0, %v739
  %v741 = vpop.f32.mrb[0].mxu0
  %v742 = vadd.f32 0.0, %v741
  %743 = vmatprep.mubr.bf16.mxu0 0
  %744 = vmatmul.mubr.bf16.gmra.mrb[0].mxu0 %v699
  %v745 = vpop.f32.mrb[0].mxu0
  %v746 = vadd.f32 0.0, %v745
  %v747 = vpop.f32.mrb[0].mxu0
  %v748 = vadd.f32 0.0, %v747
  %v749 = vpop.f32.mrb[0].mxu0
  %v750 = vadd.f32 0.0, %v749
  %v751 = vpop.f32.mrb[0].mxu0
  %v752 = vadd.f32 0.0, %v751
  %753 = vdwg.mxu0
  %754 = vmatprep.subr.bf16.mxu0 %v671
  %755 = vmatpush1.bf16.msra.mxu0 %v670
  %756 = vmatprep.subr.bf16.mxu0 %v675
  %757 = vmatpush1.bf16.msra.mxu0 %v674
  %758 = vmatprep.subr.bf16.mxu0 %v679
  %759 = vmatpush1.bf16.msra.mxu0 %v678
  %760 = vmatprep.subr.bf16.mxu0 0
  %761 = vmatpush1.bf16.msra.mxu0 0
  %762 = vmatprep.subr.bf16.mxu0 0
  %763 = vmatpush1.bf16.msra.mxu0 0
  %764 = vmatprep.subr.bf16.mxu0 0
  %765 = vmatpush1.bf16.msra.mxu0 0
  %766 = vmatprep.subr.bf16.mxu0 0
  %767 = vmatpush1.bf16.msra.mxu0 0
  %768 = vmatprep.subr.bf16.mxu0 0
  %769 = vmatpush1.bf16.msra.mxu0 0
  %770 = vmatprep.subr.bf16.mxu0 0
  %771 = vmatpush1.bf16.msra.mxu0 0
  %772 = vmatprep.subr.bf16.mxu0 0
  %773 = vmatpush1.bf16.msra.mxu0 0
  %774 = vmatprep.subr.bf16.mxu0 0
  %775 = vmatpush1.bf16.msra.mxu0 0
  %776 = vmatprep.subr.bf16.mxu0 0
  %777 = vmatpush1.bf16.msra.mxu0 0
  %778 = vmatprep.subr.bf16.mxu0 0
  %779 = vmatpush1.bf16.msra.mxu0 0
  %780 = vmatprep.subr.bf16.mxu0 0
  %781 = vmatpush1.bf16.msra.mxu0 0
  %782 = vmatprep.subr.bf16.mxu0 0
  %783 = vmatpush1.bf16.msra.mxu0 0
  %784 = vmatprep.subr.bf16.mxu0 0
  %785 = vmatpush1.bf16.msra.mxu0 0
  %786 = vmatprep.mubr.bf16.mxu0 0
  %787 = vmatmul.mubr.bf16.gmra.mrb[0].mxu0 %v696
  %v788 = vpop.f32.mrb[0].mxu0
  %v789 = vadd.f32 0.0, %v788
  %v790 = vpop.f32.mrb[0].mxu0
  %v791 = vadd.f32 0.0, %v790
  %v792 = vpop.f32.mrb[0].mxu0
  %v793 = vadd.f32 0.0, %v792
  %v794 = vpop.f32.mrb[0].mxu0
  %v795 = vadd.f32 0.0, %v794
  %796 = vmatprep.mubr.bf16.mxu0 0
  %797 = vmatmul.mubr.bf16.gmra.mrb[0].mxu0 %v699
  %v798 = vpop.f32.mrb[0].mxu0
  %v799 = vadd.f32 0.0, %v798
  %v800 = vpop.f32.mrb[0].mxu0
  %v801 = vadd.f32 0.0, %v800
  %v802 = vpop.f32.mrb[0].mxu0
  %v803 = vadd.f32 0.0, %v802
  %v804 = vpop.f32.mrb[0].mxu0
  %v805 = vadd.f32 0.0, %v804
  %806 = vdwg.mxu0
  %v807 = vld [vmem:[%s7 + $0x10] sm:$0xff]
  %v808 = vld [vmem:[%s7 + $0x18] sm:$0xff]
  %810 = vset.pattern.permute.xlu0 0
  %811 = vperm.xlu0 %810, %v807
  %v812 = vpop.permute.xlu0 %811
  %815 = vset.pattern.permute.xlu0 0
  %816 = vperm.xlu0 %815, %v808
  %v817 = vpop.permute.xlu0 %816
  %v819 = vadd.f32 %v736, %v812
  %v820 = vadd.f32 %v738, %v812
  %v821 = vadd.f32 %v789, %v812
  %v822 = vadd.f32 %v791, %v812
  %v823 = vadd.f32 %v740, %v817
  %v824 = vadd.f32 %v742, %v817
  %v825 = vadd.f32 %v793, %v817
  %v826 = vadd.f32 %v795, %v817
  %827 = vrot.lane.b32.xlu0 %v746, 1
  %v828 = vpop.permute.xlu0 %827
  %829 = vrot.lane.b32.xlu0 %v750, 1
  %v830 = vpop.permute.xlu0 %829
  %831 = vrot.lane.b32.xlu0 %v748, 1
  %v832 = vpop.permute.xlu0 %831
  %833 = vrot.lane.b32.xlu0 %v752, 1
  %v834 = vpop.permute.xlu0 %833
  %835 = vrot.lane.b32.xlu0 %v799, 1
  %v836 = vpop.permute.xlu0 %835
  %837 = vrot.lane.b32.xlu0 %v803, 1
  %v838 = vpop.permute.xlu0 %837
  %839 = vrot.lane.b32.xlu0 %v801, 1
  %v840 = vpop.permute.xlu0 %839
  %841 = vrot.lane.b32.xlu0 %v805, 1
  %v842 = vpop.permute.xlu0 %841
  %v843 = vsel %vm404, %v836, %v840
  %v844 = vsel %vm404, %v838, %v842
  %v845 = vsel %vm404, %v832, %v836
  %v846 = vsel %vm404, %v834, %v838
  %v847 = vsel %vm404, %v828, %v832
  %v848 = vsel %vm404, %v830, %v834
  %v849 = vsel %vm404, %v840, %v828
  %v850 = vsel %vm404, %v842, %v830
  %v851 = vmul.f32 %v849, %v417
  %v852 = vmul.f32 %v847, %v421
  %v853 = vmul.f32 %v845, %v425
  %v854 = vmul.f32 %v843, %v429
  %v855 = vmul.f32 %v850, %v417
  %v856 = vmul.f32 %v848, %v421
  %v857 = vmul.f32 %v846, %v425
  %v858 = vmul.f32 %v844, %v429
  %v859 = vadd.f32 %v746, %v851
  %v860 = vadd.f32 %v748, %v852
  %v861 = vadd.f32 %v799, %v853
  %v862 = vadd.f32 %v801, %v854
  %v863 = vadd.f32 %v750, %v855
  %v864 = vadd.f32 %v752, %v856
  %v865 = vadd.f32 %v803, %v857
  %v866 = vadd.f32 %v805, %v858
  %867 = vrot.lane.b32.xlu0 %v746, 127
  %v868 = vpop.permute.xlu0 %867
  %869 = vrot.lane.b32.xlu0 %v750, 127
  %v870 = vpop.permute.xlu0 %869
  %871 = vrot.lane.b32.xlu0 %v748, 127
  %v872 = vpop.permute.xlu0 %871
  %873 = vrot.lane.b32.xlu0 %v752, 127
  %v874 = vpop.permute.xlu0 %873
  %875 = vrot.lane.b32.xlu0 %v799, 127
  %v876 = vpop.permute.xlu0 %875
  %877 = vrot.lane.b32.xlu0 %v803, 127
  %v878 = vpop.permute.xlu0 %877
  %879 = vrot.lane.b32.xlu0 %v801, 127
  %v880 = vpop.permute.xlu0 %879
  %881 = vrot.lane.b32.xlu0 %v805, 127
  %v882 = vpop.permute.xlu0 %881
  %v883 = vsel %vm466, %v876, %v880
  %v884 = vsel %vm466, %v878, %v882
  %v885 = vsel %vm466, %v872, %v876
  %v886 = vsel %vm466, %v874, %v878
  %v887 = vsel %vm466, %v868, %v872
  %v888 = vsel %vm466, %v870, %v874
  %v889 = vsel %vm466, %v880, %v868
  %v890 = vsel %vm466, %v882, %v870
  %v891 = vmul.f32 %v887, %v479
  %v892 = vmul.f32 %v885, %v483
  %v893 = vmul.f32 %v883, %v487
  %v894 = vmul.f32 %v889, %v491
  %v895 = vmul.f32 %v888, %v479
  %v896 = vmul.f32 %v886, %v483
  %v897 = vmul.f32 %v884, %v487
  %v898 = vmul.f32 %v890, %v491
  %v899 = vadd.f32 %v859, %v891
  %v900 = vadd.f32 %v860, %v892
  %v901 = vadd.f32 %v861, %v893
  %v902 = vadd.f32 %v862, %v894
  %v903 = vadd.f32 %v863, %v895
  %v904 = vadd.f32 %v864, %v896
  %v905 = vadd.f32 %v865, %v897
  %v906 = vadd.f32 %v866, %v898
  %907 = vrot.lane.b32.xlu0 %v899, 16
  %v908 = vpop.permute.xlu0 %907
  %909 = vrot.lane.b32.xlu0 %v903, 16
  %v910 = vpop.permute.xlu0 %909
  %911 = vrot.lane.b32.xlu0 %v900, 16
  %v912 = vpop.permute.xlu0 %911
  %913 = vrot.lane.b32.xlu0 %v904, 16
  %v914 = vpop.permute.xlu0 %913
  %915 = vrot.lane.b32.xlu0 %v901, 16
  %v916 = vpop.permute.xlu0 %915
  %917 = vrot.lane.b32.xlu0 %v905, 16
  %v918 = vpop.permute.xlu0 %917
  %919 = vrot.lane.b32.xlu0 %v902, 16
  %v920 = vpop.permute.xlu0 %919
  %921 = vrot.lane.b32.xlu0 %v906, 16
  %v922 = vpop.permute.xlu0 %921
  %v923 = vsel %vm528, %v916, %v920
  %v924 = vsel %vm528, %v918, %v922
  %v925 = vsel %vm528, %v912, %v916
  %v926 = vsel %vm528, %v914, %v918
  %v927 = vsel %vm528, %v908, %v912
  %v928 = vsel %vm528, %v910, %v914
  %v929 = vsel %vm528, %v920, %v908
  %v930 = vsel %vm528, %v922, %v910
  %v931 = vmul.f32 %v929, %v541
  %v932 = vmul.f32 %v927, %v545
  %v933 = vmul.f32 %v925, %v549
  %v934 = vmul.f32 %v923, %v553
  %v935 = vmul.f32 %v930, %v541
  %v936 = vmul.f32 %v928, %v545
  %v937 = vmul.f32 %v926, %v549
  %v938 = vmul.f32 %v924, %v553
  %v939 = vadd.f32 %v899, %v931
  %v940 = vadd.f32 %v900, %v932
  %v941 = vadd.f32 %v901, %v933
  %v942 = vadd.f32 %v902, %v934
  %v943 = vadd.f32 %v903, %v935
  %v944 = vadd.f32 %v904, %v936
  %v945 = vadd.f32 %v905, %v937
  %v946 = vadd.f32 %v906, %v938
  %947 = vrot.lane.b32.xlu0 %v899, 112
  %v948 = vpop.permute.xlu0 %947
  %949 = vrot.lane.b32.xlu0 %v903, 112
  %v950 = vpop.permute.xlu0 %949
  %951 = vrot.lane.b32.xlu0 %v900, 112
  %v952 = vpop.permute.xlu0 %951
  %953 = vrot.lane.b32.xlu0 %v904, 112
  %v954 = vpop.permute.xlu0 %953
  %955 = vrot.lane.b32.xlu0 %v901, 112
  %v956 = vpop.permute.xlu0 %955
  %957 = vrot.lane.b32.xlu0 %v905, 112
  %v958 = vpop.permute.xlu0 %957
  %959 = vrot.lane.b32.xlu0 %v902, 112
  %v960 = vpop.permute.xlu0 %959
  %961 = vrot.lane.b32.xlu0 %v906, 112
  %v962 = vpop.permute.xlu0 %961
  %v963 = vsel %vm590, %v956, %v960
  %v964 = vsel %vm590, %v958, %v962
  %v965 = vsel %vm590, %v952, %v956
  %v966 = vsel %vm590, %v954, %v958
  %v967 = vsel %vm590, %v948, %v952
  %v968 = vsel %vm590, %v950, %v954
  %v969 = vsel %vm590, %v960, %v948
  %v970 = vsel %vm590, %v962, %v950
  %v971 = vmul.f32 %v967, %v603
  %v972 = vmul.f32 %v965, %v607
  %v973 = vmul.f32 %v963, %v611
  %v974 = vmul.f32 %v969, %v615
  %v975 = vmul.f32 %v968, %v603
  %v976 = vmul.f32 %v966, %v607
  %v977 = vmul.f32 %v964, %v611
  %v978 = vmul.f32 %v970, %v615
  %v979 = vadd.f32 %v939, %v971
  %v980 = vadd.f32 %v940, %v972
  %v981 = vadd.f32 %v941, %v973
  %v982 = vadd.f32 %v942, %v974
  %v983 = vadd.f32 %v943, %v975
  %v984 = vadd.f32 %v944, %v976
  %v985 = vadd.f32 %v945, %v977
  %v986 = vadd.f32 %v946, %v978
  %v987 = vmul.f32 %v979, 0.11111111
  %v988 = vmul.f32 %v980, 0.11111111
  %v989 = vmul.f32 %v981, 0.11111111
  %v990 = vmul.f32 %v982, 0.11111111
  %v991 = vmul.f32 %v983, 0.11111111
  %v992 = vmul.f32 %v984, 0.11111111
  %v993 = vmul.f32 %v985, 0.11111111
  %v994 = vmul.f32 %v986, 0.11111111
  %v995 = vadd.f32 %v819, %v987
  %v996 = vadd.f32 %v820, %v988
  %v997 = vadd.f32 %v821, %v989
  %v998 = vadd.f32 %v822, %v990
  %v999 = vadd.f32 %v823, %v991
  %v1000 = vadd.f32 %v824, %v992
  %v1001 = vadd.f32 %v825, %v993
  %v1002 = vadd.f32 %v826, %v994
  %1003 = vst [vmem:[%s9 + $0x40] sm:$0xff] %v995
  %1004 = vst [vmem:[%s9 + $0x48] sm:$0xff] %v996
  %1005 = vst [vmem:[%s9 + $0x50] sm:$0xff] %v997
  %1006 = vst [vmem:[%s9 + $0x58] sm:$0xff] %v998
  %1007 = vst [vmem:[%s9 + $0x60] sm:$0xff] %v999
  %1008 = vst [vmem:[%s9 + $0x68] sm:$0xff] %v1000
  %1009 = vst [vmem:[%s9 + $0x70] sm:$0xff] %v1001
  %1010 = vst [vmem:[%s9 + $0x78] sm:$0xff] %v1002
  %v1011 = vpack.c.bf16 %v999, %v995
  %v1012 = vpack.c.bf16 %v1000, %v996
  %v1013 = vpack.c.bf16 %v1001, %v997
  %v1014 = vpack.c.bf16 %v1002, %v998
  %1015 = vst [vmem:[#allocation2 + $0x60] sm:$0xff] %v1011
  %1016 = vst [vmem:[#allocation2 + $0x68] sm:$0xff] %v1012
  %1017 = vst [vmem:[#allocation2 + $0x70] sm:$0xff] %v1013
  %1018 = vst [vmem:[#allocation2 + $0x78] sm:$0xff] %v1014
  %v1019 = vld [vmem:[#allocation2] sm:$0xff]
  %v1020 = vld [vmem:[#allocation2 + $0x8] sm:$0xff]
  %v1021 = vld [vmem:[#allocation2 + $0x10] sm:$0xff]
  %v1022 = vld [vmem:[#allocation2 + $0x18] sm:$0xff]
  %v1023 = vld [vmem:[#allocation2 + $0x20] sm:$0xff]
  %v1024 = vld [vmem:[#allocation2 + $0x28] sm:$0xff]
  %v1025 = vld [vmem:[#allocation2 + $0x30] sm:$0xff]
  %v1026 = vld [vmem:[#allocation2 + $0x38] sm:$0xff]
  %v1027 = vld [vmem:[#allocation2 + $0x40] sm:$0xff]
  %v1028 = vld [vmem:[#allocation2 + $0x48] sm:$0xff]
  %v1029 = vld [vmem:[#allocation2 + $0x50] sm:$0xff]
  %v1030 = vld [vmem:[#allocation2 + $0x58] sm:$0xff]
  %v1031 = vld [vmem:[#allocation2 + $0x60] sm:$0xff]
  %v1032 = vld [vmem:[#allocation2 + $0x68] sm:$0xff]
  %v1033 = vld [vmem:[#allocation2 + $0x70] sm:$0xff]
  %v1034 = vld [vmem:[#allocation2 + $0x78] sm:$0xff]
  %v1035 = vld [vmem:[%s5] sm:$0xf]
  %v1036 = vld [vmem:[%s5 + $0x4] sm:$0xf]
  %v1037 = vld [vmem:[%s5 + $0x8] sm:$0xf]
  %v1038 = vld [vmem:[%s5 + $0xc] sm:$0xf]
  %v1043 = vunpack.c.l.b16 %v1035
  %v1044 = vunpack.c.l.b16 %v1036
  %v1045 = vunpack.c.l.b16 %v1037
  %v1046 = vunpack.c.l.b16 %v1038
  %v1047 = vpack.c.b16 %v1044, %v1043
  %v1048 = vpack.c.b16 %v1046, %v1045
  %vm1049 = vcmask 523264
  %v1051 = vsel %vm1049, %v1047, 0
  %v1054 = vsel %vm1049, %v1048, 0
  %1056 = vmatprep.subr.bf16.mxu0 %v1020
  %1057 = vmatpush1.bf16.msra.mxu0 %v1019
  %1058 = vmatprep.subr.bf16.mxu0 %v1024
  %1059 = vmatpush1.bf16.msra.mxu0 %v1023
  %1060 = vmatprep.subr.bf16.mxu0 %v1028
  %1061 = vmatpush1.bf16.msra.mxu0 %v1027
  %1062 = vmatprep.subr.bf16.mxu0 %v1032
  %1063 = vmatpush1.bf16.msra.mxu0 %v1031
  %1064 = vmatprep.subr.bf16.mxu0 0
  %1065 = vmatpush1.bf16.msra.mxu0 0
  %1066 = vmatprep.subr.bf16.mxu0 0
  %1067 = vmatpush1.bf16.msra.mxu0 0
  %1068 = vmatprep.subr.bf16.mxu0 0
  %1069 = vmatpush1.bf16.msra.mxu0 0
  %1070 = vmatprep.subr.bf16.mxu0 0
  %1071 = vmatpush1.bf16.msra.mxu0 0
  %1072 = vmatprep.subr.bf16.mxu0 0
  %1073 = vmatpush1.bf16.msra.mxu0 0
  %1074 = vmatprep.subr.bf16.mxu0 0
  %1075 = vmatpush1.bf16.msra.mxu0 0
  %1076 = vmatprep.subr.bf16.mxu0 0
  %1077 = vmatpush1.bf16.msra.mxu0 0
  %1078 = vmatprep.subr.bf16.mxu0 0
  %1079 = vmatpush1.bf16.msra.mxu0 0
  %1080 = vmatprep.subr.bf16.mxu0 0
  %1081 = vmatpush1.bf16.msra.mxu0 0
  %1082 = vmatprep.subr.bf16.mxu0 0
  %1083 = vmatpush1.bf16.msra.mxu0 0
  %1084 = vmatprep.subr.bf16.mxu0 0
  %1085 = vmatpush1.bf16.msra.mxu0 0
  %1086 = vmatprep.subr.bf16.mxu0 0
  %1087 = vmatpush1.bf16.msra.mxu0 0
  %1088 = vmatprep.mubr.bf16.mxu0 0
  %1089 = vmatmul.mubr.bf16.gmra.mrb[0].mxu0 %v1051
  %v1090 = vpop.f32.mrb[0].mxu0
  %v1091 = vadd.f32 0.0, %v1090
  %v1092 = vpop.f32.mrb[0].mxu0
  %v1093 = vadd.f32 0.0, %v1092
  %v1094 = vpop.f32.mrb[0].mxu0
  %v1095 = vadd.f32 0.0, %v1094
  %v1096 = vpop.f32.mrb[0].mxu0
  %v1097 = vadd.f32 0.0, %v1096
  %1098 = vmatprep.mubr.bf16.mxu0 0
  %1099 = vmatmul.mubr.bf16.gmra.mrb[0].mxu0 %v1054
  %v1100 = vpop.f32.mrb[0].mxu0
  %v1101 = vadd.f32 0.0, %v1100
  %v1102 = vpop.f32.mrb[0].mxu0
  %v1103 = vadd.f32 0.0, %v1102
  %v1104 = vpop.f32.mrb[0].mxu0
  %v1105 = vadd.f32 0.0, %v1104
  %v1106 = vpop.f32.mrb[0].mxu0
  %v1107 = vadd.f32 0.0, %v1106
  %1108 = vdwg.mxu0
  %1109 = vmatprep.subr.bf16.mxu0 %v1022
  %1110 = vmatpush1.bf16.msra.mxu0 %v1021
  %1111 = vmatprep.subr.bf16.mxu0 %v1026
  %1112 = vmatpush1.bf16.msra.mxu0 %v1025
  %1113 = vmatprep.subr.bf16.mxu0 %v1030
  %1114 = vmatpush1.bf16.msra.mxu0 %v1029
  %1115 = vmatprep.subr.bf16.mxu0 %v1034
  %1116 = vmatpush1.bf16.msra.mxu0 %v1033
  %1117 = vmatprep.subr.bf16.mxu0 0
  %1118 = vmatpush1.bf16.msra.mxu0 0
  %1119 = vmatprep.subr.bf16.mxu0 0
  %1120 = vmatpush1.bf16.msra.mxu0 0
  %1121 = vmatprep.subr.bf16.mxu0 0
  %1122 = vmatpush1.bf16.msra.mxu0 0
  %1123 = vmatprep.subr.bf16.mxu0 0
  %1124 = vmatpush1.bf16.msra.mxu0 0
  %1125 = vmatprep.subr.bf16.mxu0 0
  %1126 = vmatpush1.bf16.msra.mxu0 0
  %1127 = vmatprep.subr.bf16.mxu0 0
  %1128 = vmatpush1.bf16.msra.mxu0 0
  %1129 = vmatprep.subr.bf16.mxu0 0
  %1130 = vmatpush1.bf16.msra.mxu0 0
  %1131 = vmatprep.subr.bf16.mxu0 0
  %1132 = vmatpush1.bf16.msra.mxu0 0
  %1133 = vmatprep.subr.bf16.mxu0 0
  %1134 = vmatpush1.bf16.msra.mxu0 0
  %1135 = vmatprep.subr.bf16.mxu0 0
  %1136 = vmatpush1.bf16.msra.mxu0 0
  %1137 = vmatprep.subr.bf16.mxu0 0
  %1138 = vmatpush1.bf16.msra.mxu0 0
  %1139 = vmatprep.subr.bf16.mxu0 0
  %1140 = vmatpush1.bf16.msra.mxu0 0
  %1141 = vmatprep.mubr.bf16.mxu0 0
  %1142 = vmatmul.mubr.bf16.gmra.mrb[0].mxu0 %v1051
  %v1143 = vpop.f32.mrb[0].mxu0
  %v1144 = vadd.f32 0.0, %v1143
  %v1145 = vpop.f32.mrb[0].mxu0
  %v1146 = vadd.f32 0.0, %v1145
  %v1147 = vpop.f32.mrb[0].mxu0
  %v1148 = vadd.f32 0.0, %v1147
  %v1149 = vpop.f32.mrb[0].mxu0
  %v1150 = vadd.f32 0.0, %v1149
  %1151 = vmatprep.mubr.bf16.mxu0 0
  %1152 = vmatmul.mubr.bf16.gmra.mrb[0].mxu0 %v1054
  %v1153 = vpop.f32.mrb[0].mxu0
  %v1154 = vadd.f32 0.0, %v1153
  %v1155 = vpop.f32.mrb[0].mxu0
  %v1156 = vadd.f32 0.0, %v1155
  %v1157 = vpop.f32.mrb[0].mxu0
  %v1158 = vadd.f32 0.0, %v1157
  %v1159 = vpop.f32.mrb[0].mxu0
  %v1160 = vadd.f32 0.0, %v1159
  %1161 = vdwg.mxu0
  %v1162 = vld [vmem:[%s7 + $0x20] sm:$0xff]
  %v1163 = vld [vmem:[%s7 + $0x28] sm:$0xff]
  %1165 = vset.pattern.permute.xlu0 0
  %1166 = vperm.xlu0 %1165, %v1162
  %v1167 = vpop.permute.xlu0 %1166
  %1170 = vset.pattern.permute.xlu0 0
  %1171 = vperm.xlu0 %1170, %v1163
  %v1172 = vpop.permute.xlu0 %1171
  %v1174 = vadd.f32 %v1091, %v1167
  %v1175 = vadd.f32 %v1093, %v1167
  %v1176 = vadd.f32 %v1144, %v1167
  %v1177 = vadd.f32 %v1146, %v1167
  %v1178 = vadd.f32 %v1095, %v1172
  %v1179 = vadd.f32 %v1097, %v1172
  %v1180 = vadd.f32 %v1148, %v1172
  %v1181 = vadd.f32 %v1150, %v1172
  %1182 = vrot.lane.b32.xlu0 %v1101, 1
  %v1183 = vpop.permute.xlu0 %1182
  %1184 = vrot.lane.b32.xlu0 %v1105, 1
  %v1185 = vpop.permute.xlu0 %1184
  %1186 = vrot.lane.b32.xlu0 %v1103, 1
  %v1187 = vpop.permute.xlu0 %1186
  %1188 = vrot.lane.b32.xlu0 %v1107, 1
  %v1189 = vpop.permute.xlu0 %1188
  %1190 = vrot.lane.b32.xlu0 %v1154, 1
  %v1191 = vpop.permute.xlu0 %1190
  %1192 = vrot.lane.b32.xlu0 %v1158, 1
  %v1193 = vpop.permute.xlu0 %1192
  %1194 = vrot.lane.b32.xlu0 %v1156, 1
  %v1195 = vpop.permute.xlu0 %1194
  %1196 = vrot.lane.b32.xlu0 %v1160, 1
  %v1197 = vpop.permute.xlu0 %1196
  %v1198 = vsel %vm404, %v1191, %v1195
  %v1199 = vsel %vm404, %v1193, %v1197
  %v1200 = vsel %vm404, %v1187, %v1191
  %v1201 = vsel %vm404, %v1189, %v1193
  %v1202 = vsel %vm404, %v1183, %v1187
  %v1203 = vsel %vm404, %v1185, %v1189
  %v1204 = vsel %vm404, %v1195, %v1183
  %v1205 = vsel %vm404, %v1197, %v1185
  %v1206 = vmul.f32 %v1204, %v417
  %v1207 = vmul.f32 %v1202, %v421
  %v1208 = vmul.f32 %v1200, %v425
  %v1209 = vmul.f32 %v1198, %v429
  %v1210 = vmul.f32 %v1205, %v417
  %v1211 = vmul.f32 %v1203, %v421
  %v1212 = vmul.f32 %v1201, %v425
  %v1213 = vmul.f32 %v1199, %v429
  %v1214 = vadd.f32 %v1101, %v1206
  %v1215 = vadd.f32 %v1103, %v1207
  %v1216 = vadd.f32 %v1154, %v1208
  %v1217 = vadd.f32 %v1156, %v1209
  %v1218 = vadd.f32 %v1105, %v1210
  %v1219 = vadd.f32 %v1107, %v1211
  %v1220 = vadd.f32 %v1158, %v1212
  %v1221 = vadd.f32 %v1160, %v1213
  %1222 = vrot.lane.b32.xlu0 %v1101, 127
  %v1223 = vpop.permute.xlu0 %1222
  %1224 = vrot.lane.b32.xlu0 %v1105, 127
  %v1225 = vpop.permute.xlu0 %1224
  %1226 = vrot.lane.b32.xlu0 %v1103, 127
  %v1227 = vpop.permute.xlu0 %1226
  %1228 = vrot.lane.b32.xlu0 %v1107, 127
  %v1229 = vpop.permute.xlu0 %1228
  %1230 = vrot.lane.b32.xlu0 %v1154, 127
  %v1231 = vpop.permute.xlu0 %1230
  %1232 = vrot.lane.b32.xlu0 %v1158, 127
  %v1233 = vpop.permute.xlu0 %1232
  %1234 = vrot.lane.b32.xlu0 %v1156, 127
  %v1235 = vpop.permute.xlu0 %1234
  %1236 = vrot.lane.b32.xlu0 %v1160, 127
  %v1237 = vpop.permute.xlu0 %1236
  %v1238 = vsel %vm466, %v1231, %v1235
  %v1239 = vsel %vm466, %v1233, %v1237
  %v1240 = vsel %vm466, %v1227, %v1231
  %v1241 = vsel %vm466, %v1229, %v1233
  %v1242 = vsel %vm466, %v1223, %v1227
  %v1243 = vsel %vm466, %v1225, %v1229
  %v1244 = vsel %vm466, %v1235, %v1223
  %v1245 = vsel %vm466, %v1237, %v1225
  %v1246 = vmul.f32 %v1242, %v479
  %v1247 = vmul.f32 %v1240, %v483
  %v1248 = vmul.f32 %v1238, %v487
  %v1249 = vmul.f32 %v1244, %v491
  %v1250 = vmul.f32 %v1243, %v479
  %v1251 = vmul.f32 %v1241, %v483
  %v1252 = vmul.f32 %v1239, %v487
  %v1253 = vmul.f32 %v1245, %v491
  %v1254 = vadd.f32 %v1214, %v1246
  %v1255 = vadd.f32 %v1215, %v1247
  %v1256 = vadd.f32 %v1216, %v1248
  %v1257 = vadd.f32 %v1217, %v1249
  %v1258 = vadd.f32 %v1218, %v1250
  %v1259 = vadd.f32 %v1219, %v1251
  %v1260 = vadd.f32 %v1220, %v1252
  %v1261 = vadd.f32 %v1221, %v1253
  %1262 = vrot.lane.b32.xlu0 %v1254, 16
  %v1263 = vpop.permute.xlu0 %1262
  %1264 = vrot.lane.b32.xlu0 %v1258, 16
  %v1265 = vpop.permute.xlu0 %1264
  %1266 = vrot.lane.b32.xlu0 %v1255, 16
  %v1267 = vpop.permute.xlu0 %1266
  %1268 = vrot.lane.b32.xlu0 %v1259, 16
  %v1269 = vpop.permute.xlu0 %1268
  %1270 = vrot.lane.b32.xlu0 %v1256, 16
  %v1271 = vpop.permute.xlu0 %1270
  %1272 = vrot.lane.b32.xlu0 %v1260, 16
  %v1273 = vpop.permute.xlu0 %1272
  %1274 = vrot.lane.b32.xlu0 %v1257, 16
  %v1275 = vpop.permute.xlu0 %1274
  %1276 = vrot.lane.b32.xlu0 %v1261, 16
  %v1277 = vpop.permute.xlu0 %1276
  %v1278 = vsel %vm528, %v1271, %v1275
  %v1279 = vsel %vm528, %v1273, %v1277
  %v1280 = vsel %vm528, %v1267, %v1271
  %v1281 = vsel %vm528, %v1269, %v1273
  %v1282 = vsel %vm528, %v1263, %v1267
  %v1283 = vsel %vm528, %v1265, %v1269
  %v1284 = vsel %vm528, %v1275, %v1263
  %v1285 = vsel %vm528, %v1277, %v1265
  %v1286 = vmul.f32 %v1284, %v541
  %v1287 = vmul.f32 %v1282, %v545
  %v1288 = vmul.f32 %v1280, %v549
  %v1289 = vmul.f32 %v1278, %v553
  %v1290 = vmul.f32 %v1285, %v541
  %v1291 = vmul.f32 %v1283, %v545
  %v1292 = vmul.f32 %v1281, %v549
  %v1293 = vmul.f32 %v1279, %v553
  %v1294 = vadd.f32 %v1254, %v1286
  %v1295 = vadd.f32 %v1255, %v1287
  %v1296 = vadd.f32 %v1256, %v1288
  %v1297 = vadd.f32 %v1257, %v1289
  %v1298 = vadd.f32 %v1258, %v1290
  %v1299 = vadd.f32 %v1259, %v1291
  %v1300 = vadd.f32 %v1260, %v1292
  %v1301 = vadd.f32 %v1261, %v1293
  %1302 = vrot.lane.b32.xlu0 %v1254, 112
  %v1303 = vpop.permute.xlu0 %1302
  %1304 = vrot.lane.b32.xlu0 %v1258, 112
  %v1305 = vpop.permute.xlu0 %1304
  %1306 = vrot.lane.b32.xlu0 %v1255, 112
  %v1307 = vpop.permute.xlu0 %1306
  %1308 = vrot.lane.b32.xlu0 %v1259, 112
  %v1309 = vpop.permute.xlu0 %1308
  %1310 = vrot.lane.b32.xlu0 %v1256, 112
  %v1311 = vpop.permute.xlu0 %1310
  %1312 = vrot.lane.b32.xlu0 %v1260, 112
  %v1313 = vpop.permute.xlu0 %1312
  %1314 = vrot.lane.b32.xlu0 %v1257, 112
  %v1315 = vpop.permute.xlu0 %1314
  %1316 = vrot.lane.b32.xlu0 %v1261, 112
  %v1317 = vpop.permute.xlu0 %1316
  %v1318 = vsel %vm590, %v1311, %v1315
  %v1319 = vsel %vm590, %v1313, %v1317
  %v1320 = vsel %vm590, %v1307, %v1311
  %v1321 = vsel %vm590, %v1309, %v1313
  %v1322 = vsel %vm590, %v1303, %v1307
  %v1323 = vsel %vm590, %v1305, %v1309
  %v1324 = vsel %vm590, %v1315, %v1303
  %v1325 = vsel %vm590, %v1317, %v1305
  %v1326 = vmul.f32 %v1322, %v603
  %v1327 = vmul.f32 %v1320, %v607
  %v1328 = vmul.f32 %v1318, %v611
  %v1329 = vmul.f32 %v1324, %v615
  %v1330 = vmul.f32 %v1323, %v603
  %v1331 = vmul.f32 %v1321, %v607
  %v1332 = vmul.f32 %v1319, %v611
  %v1333 = vmul.f32 %v1325, %v615
  %v1334 = vadd.f32 %v1294, %v1326
  %v1335 = vadd.f32 %v1295, %v1327
  %v1336 = vadd.f32 %v1296, %v1328
  %v1337 = vadd.f32 %v1297, %v1329
  %v1338 = vadd.f32 %v1298, %v1330
  %v1339 = vadd.f32 %v1299, %v1331
  %v1340 = vadd.f32 %v1300, %v1332
  %v1341 = vadd.f32 %v1301, %v1333
  %v1342 = vmul.f32 %v1334, 0.11111111
  %v1343 = vmul.f32 %v1335, 0.11111111
  %v1344 = vmul.f32 %v1336, 0.11111111
  %v1345 = vmul.f32 %v1337, 0.11111111
  %v1346 = vmul.f32 %v1338, 0.11111111
  %v1347 = vmul.f32 %v1339, 0.11111111
  %v1348 = vmul.f32 %v1340, 0.11111111
  %v1349 = vmul.f32 %v1341, 0.11111111
  %v1350 = vadd.f32 %v1174, %v1342
  %v1351 = vadd.f32 %v1175, %v1343
  %v1352 = vadd.f32 %v1176, %v1344
  %v1353 = vadd.f32 %v1177, %v1345
  %v1354 = vadd.f32 %v1178, %v1346
  %v1355 = vadd.f32 %v1179, %v1347
  %v1356 = vadd.f32 %v1180, %v1348
  %v1357 = vadd.f32 %v1181, %v1349
  %1358 = vst [vmem:[%s9 + $0x80] sm:$0xff] %v1350
  %1359 = vst [vmem:[%s9 + $0x88] sm:$0xff] %v1351
  %1360 = vst [vmem:[%s9 + $0x90] sm:$0xff] %v1352
  %1361 = vst [vmem:[%s9 + $0x98] sm:$0xff] %v1353
  %1362 = vst [vmem:[%s9 + $0xa0] sm:$0xff] %v1354
  %1363 = vst [vmem:[%s9 + $0xa8] sm:$0xff] %v1355
  %1364 = vst [vmem:[%s9 + $0xb0] sm:$0xff] %v1356
  %1365 = vst [vmem:[%s9 + $0xb8] sm:$0xff] %v1357
  %v1366 = vpack.c.bf16 %v1354, %v1350
  %v1367 = vpack.c.bf16 %v1355, %v1351
  %v1368 = vpack.c.bf16 %v1356, %v1352
  %v1369 = vpack.c.bf16 %v1357, %v1353
  %1370 = vst [vmem:[#allocation2 + $0x80] sm:$0xff] %v1366
  %1371 = vst [vmem:[#allocation2 + $0x88] sm:$0xff] %v1367
  %1372 = vst [vmem:[#allocation2 + $0x90] sm:$0xff] %v1368
  %1373 = vst [vmem:[#allocation2 + $0x98] sm:$0xff] %v1369
  %v1374 = vld [vmem:[#allocation2] sm:$0xff]
  %v1375 = vld [vmem:[#allocation2 + $0x8] sm:$0xff]
  %v1376 = vld [vmem:[#allocation2 + $0x10] sm:$0xff]
  %v1377 = vld [vmem:[#allocation2 + $0x18] sm:$0xff]
  %v1378 = vld [vmem:[#allocation2 + $0x20] sm:$0xff]
  %v1379 = vld [vmem:[#allocation2 + $0x28] sm:$0xff]
  %v1380 = vld [vmem:[#allocation2 + $0x30] sm:$0xff]
  %v1381 = vld [vmem:[#allocation2 + $0x38] sm:$0xff]
  %v1382 = vld [vmem:[#allocation2 + $0x40] sm:$0xff]
  %v1383 = vld [vmem:[#allocation2 + $0x48] sm:$0xff]
  %v1384 = vld [vmem:[#allocation2 + $0x50] sm:$0xff]
  %v1385 = vld [vmem:[#allocation2 + $0x58] sm:$0xff]
  %v1386 = vld [vmem:[#allocation2 + $0x60] sm:$0xff]
  %v1387 = vld [vmem:[#allocation2 + $0x68] sm:$0xff]
  %v1388 = vld [vmem:[#allocation2 + $0x70] sm:$0xff]
  %v1389 = vld [vmem:[#allocation2 + $0x78] sm:$0xff]
  %v1390 = vld [vmem:[#allocation2 + $0x80] sm:$0xff]
  %v1391 = vld [vmem:[#allocation2 + $0x88] sm:$0xff]
  %v1392 = vld [vmem:[#allocation2 + $0x90] sm:$0xff]
  %v1393 = vld [vmem:[#allocation2 + $0x98] sm:$0xff]
  %v1394 = vld [vmem:[%s6] sm:$0xf]
  %v1395 = vld [vmem:[%s6 + $0x4] sm:$0xf]
  %v1396 = vld [vmem:[%s6 + $0x8] sm:$0xf]
  %v1397 = vld [vmem:[%s6 + $0xc] sm:$0xf]
  %v1402 = vunpack.c.l.b16 %v1394
  %v1403 = vunpack.c.l.b16 %v1395
  %v1404 = vunpack.c.l.b16 %v1396
  %v1405 = vunpack.c.l.b16 %v1397
  %v1406 = vpack.c.b16 %v1403, %v1402
  %v1407 = vpack.c.b16 %v1405, %v1404
  %vm1408 = vcmask 654336
  %v1410 = vsel %vm1408, %v1406, 0
  %v1413 = vsel %vm1408, %v1407, 0
  %1415 = vmatprep.subr.bf16.mxu0 %v1375
  %1416 = vmatpush1.bf16.msra.mxu0 %v1374
  %1417 = vmatprep.subr.bf16.mxu0 %v1379
  %1418 = vmatpush1.bf16.msra.mxu0 %v1378
  %1419 = vmatprep.subr.bf16.mxu0 %v1383
  %1420 = vmatpush1.bf16.msra.mxu0 %v1382
  %1421 = vmatprep.subr.bf16.mxu0 %v1387
  %1422 = vmatpush1.bf16.msra.mxu0 %v1386
  %1423 = vmatprep.subr.bf16.mxu0 %v1391
  %1424 = vmatpush1.bf16.msra.mxu0 %v1390
  %1425 = vmatprep.subr.bf16.mxu0 0
  %1426 = vmatpush1.bf16.msra.mxu0 0
  %1427 = vmatprep.subr.bf16.mxu0 0
  %1428 = vmatpush1.bf16.msra.mxu0 0
  %1429 = vmatprep.subr.bf16.mxu0 0
  %1430 = vmatpush1.bf16.msra.mxu0 0
  %1431 = vmatprep.subr.bf16.mxu0 0
  %1432 = vmatpush1.bf16.msra.mxu0 0
  %1433 = vmatprep.subr.bf16.mxu0 0
  %1434 = vmatpush1.bf16.msra.mxu0 0
  %1435 = vmatprep.subr.bf16.mxu0 0
  %1436 = vmatpush1.bf16.msra.mxu0 0
  %1437 = vmatprep.subr.bf16.mxu0 0
  %1438 = vmatpush1.bf16.msra.mxu0 0
  %1439 = vmatprep.subr.bf16.mxu0 0
  %1440 = vmatpush1.bf16.msra.mxu0 0
  %1441 = vmatprep.subr.bf16.mxu0 0
  %1442 = vmatpush1.bf16.msra.mxu0 0
  %1443 = vmatprep.subr.bf16.mxu0 0
  %1444 = vmatpush1.bf16.msra.mxu0 0
  %1445 = vmatprep.subr.bf16.mxu0 0
  %1446 = vmatpush1.bf16.msra.mxu0 0
  %1447 = vmatprep.mubr.bf16.mxu0 0
  %1448 = vmatmul.mubr.bf16.gmra.mrb[0].mxu0 %v1410
  %v1449 = vpop.f32.mrb[0].mxu0
  %v1450 = vadd.f32 0.0, %v1449
  %v1451 = vpop.f32.mrb[0].mxu0
  %v1452 = vadd.f32 0.0, %v1451
  %v1453 = vpop.f32.mrb[0].mxu0
  %v1454 = vadd.f32 0.0, %v1453
  %v1455 = vpop.f32.mrb[0].mxu0
  %v1456 = vadd.f32 0.0, %v1455
  %1457 = vmatprep.mubr.bf16.mxu0 0
  %1458 = vmatmul.mubr.bf16.gmra.mrb[0].mxu0 %v1413
  %v1459 = vpop.f32.mrb[0].mxu0
  %v1460 = vadd.f32 0.0, %v1459
  %v1461 = vpop.f32.mrb[0].mxu0
  %v1462 = vadd.f32 0.0, %v1461
  %v1463 = vpop.f32.mrb[0].mxu0
  %v1464 = vadd.f32 0.0, %v1463
  %v1465 = vpop.f32.mrb[0].mxu0
  %v1466 = vadd.f32 0.0, %v1465
  %1467 = vdwg.mxu0
  %1468 = vmatprep.subr.bf16.mxu0 %v1377
  %1469 = vmatpush1.bf16.msra.mxu0 %v1376
  %1470 = vmatprep.subr.bf16.mxu0 %v1381
  %1471 = vmatpush1.bf16.msra.mxu0 %v1380
  %1472 = vmatprep.subr.bf16.mxu0 %v1385
  %1473 = vmatpush1.bf16.msra.mxu0 %v1384
  %1474 = vmatprep.subr.bf16.mxu0 %v1389
  %1475 = vmatpush1.bf16.msra.mxu0 %v1388
  %1476 = vmatprep.subr.bf16.mxu0 %v1393
  %1477 = vmatpush1.bf16.msra.mxu0 %v1392
  %1478 = vmatprep.subr.bf16.mxu0 0
  %1479 = vmatpush1.bf16.msra.mxu0 0
  %1480 = vmatprep.subr.bf16.mxu0 0
  %1481 = vmatpush1.bf16.msra.mxu0 0
  %1482 = vmatprep.subr.bf16.mxu0 0
  %1483 = vmatpush1.bf16.msra.mxu0 0
  %1484 = vmatprep.subr.bf16.mxu0 0
  %1485 = vmatpush1.bf16.msra.mxu0 0
  %1486 = vmatprep.subr.bf16.mxu0 0
  %1487 = vmatpush1.bf16.msra.mxu0 0
  %1488 = vmatprep.subr.bf16.mxu0 0
  %1489 = vmatpush1.bf16.msra.mxu0 0
  %1490 = vmatprep.subr.bf16.mxu0 0
  %1491 = vmatpush1.bf16.msra.mxu0 0
  %1492 = vmatprep.subr.bf16.mxu0 0
  %1493 = vmatpush1.bf16.msra.mxu0 0
  %1494 = vmatprep.subr.bf16.mxu0 0
  %1495 = vmatpush1.bf16.msra.mxu0 0
  %1496 = vmatprep.subr.bf16.mxu0 0
  %1497 = vmatpush1.bf16.msra.mxu0 0
  %1498 = vmatprep.subr.bf16.mxu0 0
  %1499 = vmatpush1.bf16.msra.mxu0 0
  %1500 = vmatprep.mubr.bf16.mxu0 0
  %1501 = vmatmul.mubr.bf16.gmra.mrb[0].mxu0 %v1410
  %v1502 = vpop.f32.mrb[0].mxu0
  %v1503 = vadd.f32 0.0, %v1502
  %v1504 = vpop.f32.mrb[0].mxu0
  %v1505 = vadd.f32 0.0, %v1504
  %v1506 = vpop.f32.mrb[0].mxu0
  %v1507 = vadd.f32 0.0, %v1506
  %v1508 = vpop.f32.mrb[0].mxu0
  %v1509 = vadd.f32 0.0, %v1508
  %1510 = vmatprep.mubr.bf16.mxu0 0
  %1511 = vmatmul.mubr.bf16.gmra.mrb[0].mxu0 %v1413
  %v1512 = vpop.f32.mrb[0].mxu0
  %v1513 = vadd.f32 0.0, %v1512
  %v1514 = vpop.f32.mrb[0].mxu0
  %v1515 = vadd.f32 0.0, %v1514
  %v1516 = vpop.f32.mrb[0].mxu0
  %v1517 = vadd.f32 0.0, %v1516
  %v1518 = vpop.f32.mrb[0].mxu0
  %v1519 = vadd.f32 0.0, %v1518
  %1520 = vdwg.mxu0
  %v1521 = vld [vmem:[%s7 + $0x30] sm:$0xff]
  %v1522 = vld [vmem:[%s7 + $0x38] sm:$0xff]
  %1524 = vset.pattern.permute.xlu0 0
  %1525 = vperm.xlu0 %1524, %v1521
  %v1526 = vpop.permute.xlu0 %1525
  %1529 = vset.pattern.permute.xlu0 0
  %1530 = vperm.xlu0 %1529, %v1522
  %v1531 = vpop.permute.xlu0 %1530
  %v1533 = vadd.f32 %v1450, %v1526
  %v1534 = vadd.f32 %v1452, %v1526
  %v1535 = vadd.f32 %v1503, %v1526
  %v1536 = vadd.f32 %v1505, %v1526
  %v1537 = vadd.f32 %v1454, %v1531
  %v1538 = vadd.f32 %v1456, %v1531
  %v1539 = vadd.f32 %v1507, %v1531
  %v1540 = vadd.f32 %v1509, %v1531
  %1541 = vrot.lane.b32.xlu0 %v1460, 1
  %v1542 = vpop.permute.xlu0 %1541
  %1543 = vrot.lane.b32.xlu0 %v1464, 1
  %v1544 = vpop.permute.xlu0 %1543
  %1545 = vrot.lane.b32.xlu0 %v1462, 1
  %v1546 = vpop.permute.xlu0 %1545
  %1547 = vrot.lane.b32.xlu0 %v1466, 1
  %v1548 = vpop.permute.xlu0 %1547
  %1549 = vrot.lane.b32.xlu0 %v1513, 1
  %v1550 = vpop.permute.xlu0 %1549
  %1551 = vrot.lane.b32.xlu0 %v1517, 1
  %v1552 = vpop.permute.xlu0 %1551
  %1553 = vrot.lane.b32.xlu0 %v1515, 1
  %v1554 = vpop.permute.xlu0 %1553
  %1555 = vrot.lane.b32.xlu0 %v1519, 1
  %v1556 = vpop.permute.xlu0 %1555
  %v1557 = vsel %vm404, %v1550, %v1554
  %v1558 = vsel %vm404, %v1552, %v1556
  %v1559 = vsel %vm404, %v1546, %v1550
  %v1560 = vsel %vm404, %v1548, %v1552
  %v1561 = vsel %vm404, %v1542, %v1546
  %v1562 = vsel %vm404, %v1544, %v1548
  %v1563 = vsel %vm404, %v1554, %v1542
  %v1564 = vsel %vm404, %v1556, %v1544
  %v1565 = vmul.f32 %v1563, %v417
  %v1566 = vmul.f32 %v1561, %v421
  %v1567 = vmul.f32 %v1559, %v425
  %v1568 = vmul.f32 %v1557, %v429
  %v1569 = vmul.f32 %v1564, %v417
  %v1570 = vmul.f32 %v1562, %v421
  %v1571 = vmul.f32 %v1560, %v425
  %v1572 = vmul.f32 %v1558, %v429
  %v1573 = vadd.f32 %v1460, %v1565
  %v1574 = vadd.f32 %v1462, %v1566
  %v1575 = vadd.f32 %v1513, %v1567
  %v1576 = vadd.f32 %v1515, %v1568
  %v1577 = vadd.f32 %v1464, %v1569
  %v1578 = vadd.f32 %v1466, %v1570
  %v1579 = vadd.f32 %v1517, %v1571
  %v1580 = vadd.f32 %v1519, %v1572
  %1581 = vrot.lane.b32.xlu0 %v1460, 127
  %v1582 = vpop.permute.xlu0 %1581
  %1583 = vrot.lane.b32.xlu0 %v1464, 127
  %v1584 = vpop.permute.xlu0 %1583
  %1585 = vrot.lane.b32.xlu0 %v1462, 127
  %v1586 = vpop.permute.xlu0 %1585
  %1587 = vrot.lane.b32.xlu0 %v1466, 127
  %v1588 = vpop.permute.xlu0 %1587
  %1589 = vrot.lane.b32.xlu0 %v1513, 127
  %v1590 = vpop.permute.xlu0 %1589
  %1591 = vrot.lane.b32.xlu0 %v1517, 127
  %v1592 = vpop.permute.xlu0 %1591
  %1593 = vrot.lane.b32.xlu0 %v1515, 127
  %v1594 = vpop.permute.xlu0 %1593
  %1595 = vrot.lane.b32.xlu0 %v1519, 127
  %v1596 = vpop.permute.xlu0 %1595
  %v1597 = vsel %vm466, %v1590, %v1594
  %v1598 = vsel %vm466, %v1592, %v1596
  %v1599 = vsel %vm466, %v1586, %v1590
  %v1600 = vsel %vm466, %v1588, %v1592
  %v1601 = vsel %vm466, %v1582, %v1586
  %v1602 = vsel %vm466, %v1584, %v1588
  %v1603 = vsel %vm466, %v1594, %v1582
  %v1604 = vsel %vm466, %v1596, %v1584
  %v1605 = vmul.f32 %v1601, %v479
  %v1606 = vmul.f32 %v1599, %v483
  %v1607 = vmul.f32 %v1597, %v487
  %v1608 = vmul.f32 %v1603, %v491
  %v1609 = vmul.f32 %v1602, %v479
  %v1610 = vmul.f32 %v1600, %v483
  %v1611 = vmul.f32 %v1598, %v487
  %v1612 = vmul.f32 %v1604, %v491
  %v1613 = vadd.f32 %v1573, %v1605
  %v1614 = vadd.f32 %v1574, %v1606
  %v1615 = vadd.f32 %v1575, %v1607
  %v1616 = vadd.f32 %v1576, %v1608
  %v1617 = vadd.f32 %v1577, %v1609
  %v1618 = vadd.f32 %v1578, %v1610
  %v1619 = vadd.f32 %v1579, %v1611
  %v1620 = vadd.f32 %v1580, %v1612
  %1621 = vrot.lane.b32.xlu0 %v1613, 16
  %v1622 = vpop.permute.xlu0 %1621
  %1623 = vrot.lane.b32.xlu0 %v1617, 16
  %v1624 = vpop.permute.xlu0 %1623
  %1625 = vrot.lane.b32.xlu0 %v1614, 16
  %v1626 = vpop.permute.xlu0 %1625
  %1627 = vrot.lane.b32.xlu0 %v1618, 16
  %v1628 = vpop.permute.xlu0 %1627
  %1629 = vrot.lane.b32.xlu0 %v1615, 16
  %v1630 = vpop.permute.xlu0 %1629
  %1631 = vrot.lane.b32.xlu0 %v1619, 16
  %v1632 = vpop.permute.xlu0 %1631
  %1633 = vrot.lane.b32.xlu0 %v1616, 16
  %v1634 = vpop.permute.xlu0 %1633
  %1635 = vrot.lane.b32.xlu0 %v1620, 16
  %v1636 = vpop.permute.xlu0 %1635
  %v1637 = vsel %vm528, %v1630, %v1634
  %v1638 = vsel %vm528, %v1632, %v1636
  %v1639 = vsel %vm528, %v1626, %v1630
  %v1640 = vsel %vm528, %v1628, %v1632
  %v1641 = vsel %vm528, %v1622, %v1626
  %v1642 = vsel %vm528, %v1624, %v1628
  %v1643 = vsel %vm528, %v1634, %v1622
  %v1644 = vsel %vm528, %v1636, %v1624
  %v1645 = vmul.f32 %v1643, %v541
  %v1646 = vmul.f32 %v1641, %v545
  %v1647 = vmul.f32 %v1639, %v549
  %v1648 = vmul.f32 %v1637, %v553
  %v1649 = vmul.f32 %v1644, %v541
  %v1650 = vmul.f32 %v1642, %v545
  %v1651 = vmul.f32 %v1640, %v549
  %v1652 = vmul.f32 %v1638, %v553
  %v1653 = vadd.f32 %v1613, %v1645
  %v1654 = vadd.f32 %v1614, %v1646
  %v1655 = vadd.f32 %v1615, %v1647
  %v1656 = vadd.f32 %v1616, %v1648
  %v1657 = vadd.f32 %v1617, %v1649
  %v1658 = vadd.f32 %v1618, %v1650
  %v1659 = vadd.f32 %v1619, %v1651
  %v1660 = vadd.f32 %v1620, %v1652
  %1661 = vrot.lane.b32.xlu0 %v1613, 112
  %v1662 = vpop.permute.xlu0 %1661
  %1663 = vrot.lane.b32.xlu0 %v1617, 112
  %v1664 = vpop.permute.xlu0 %1663
  %1665 = vrot.lane.b32.xlu0 %v1614, 112
  %v1666 = vpop.permute.xlu0 %1665
  %1667 = vrot.lane.b32.xlu0 %v1618, 112
  %v1668 = vpop.permute.xlu0 %1667
  %1669 = vrot.lane.b32.xlu0 %v1615, 112
  %v1670 = vpop.permute.xlu0 %1669
  %1671 = vrot.lane.b32.xlu0 %v1619, 112
  %v1672 = vpop.permute.xlu0 %1671
  %1673 = vrot.lane.b32.xlu0 %v1616, 112
  %v1674 = vpop.permute.xlu0 %1673
  %1675 = vrot.lane.b32.xlu0 %v1620, 112
  %v1676 = vpop.permute.xlu0 %1675
  %v1677 = vsel %vm590, %v1670, %v1674
  %v1678 = vsel %vm590, %v1672, %v1676
  %v1679 = vsel %vm590, %v1666, %v1670
  %v1680 = vsel %vm590, %v1668, %v1672
  %v1681 = vsel %vm590, %v1662, %v1666
  %v1682 = vsel %vm590, %v1664, %v1668
  %v1683 = vsel %vm590, %v1674, %v1662
  %v1684 = vsel %vm590, %v1676, %v1664
  %v1685 = vmul.f32 %v1681, %v603
  %v1686 = vmul.f32 %v1679, %v607
  %v1687 = vmul.f32 %v1677, %v611
  %v1688 = vmul.f32 %v1683, %v615
  %v1689 = vmul.f32 %v1682, %v603
  %v1690 = vmul.f32 %v1680, %v607
  %v1691 = vmul.f32 %v1678, %v611
  %v1692 = vmul.f32 %v1684, %v615
  %v1693 = vadd.f32 %v1653, %v1685
  %v1694 = vadd.f32 %v1654, %v1686
  %v1695 = vadd.f32 %v1655, %v1687
  %v1696 = vadd.f32 %v1656, %v1688
  %v1697 = vadd.f32 %v1657, %v1689
  %v1698 = vadd.f32 %v1658, %v1690
  %v1699 = vadd.f32 %v1659, %v1691
  %v1700 = vadd.f32 %v1660, %v1692
  %v1701 = vmul.f32 %v1693, 0.11111111
  %v1702 = vmul.f32 %v1694, 0.11111111
  %v1703 = vmul.f32 %v1695, 0.11111111
  %v1704 = vmul.f32 %v1696, 0.11111111
  %v1705 = vmul.f32 %v1697, 0.11111111
  %v1706 = vmul.f32 %v1698, 0.11111111
  %v1707 = vmul.f32 %v1699, 0.11111111
  %v1708 = vmul.f32 %v1700, 0.11111111
  %v1709 = vadd.f32 %v1533, %v1701
  %v1710 = vadd.f32 %v1534, %v1702
  %v1711 = vadd.f32 %v1535, %v1703
  %v1712 = vadd.f32 %v1536, %v1704
  %v1713 = vadd.f32 %v1537, %v1705
  %v1714 = vadd.f32 %v1538, %v1706
  %v1715 = vadd.f32 %v1539, %v1707
  %v1716 = vadd.f32 %v1540, %v1708
  %1717 = vst [vmem:[%s9 + $0xc0] sm:$0xff] %v1709
  %1718 = vst [vmem:[%s9 + $0xc8] sm:$0xff] %v1710
  %1719 = vst [vmem:[%s9 + $0xd0] sm:$0xff] %v1711
  %1720 = vst [vmem:[%s9 + $0xd8] sm:$0xff] %v1712
  %1721 = vst [vmem:[%s9 + $0xe0] sm:$0xff] %v1713
  %1722 = vst [vmem:[%s9 + $0xe8] sm:$0xff] %v1714
  %1723 = vst [vmem:[%s9 + $0xf0] sm:$0xff] %v1715
  %1724 = vst [vmem:[%s9 + $0xf8] sm:$0xff] %v1716
  // Predicated region
  $region38: #{cell_forward.1} parent=0 // pred_check
    _
  $region39: #{cell_forward.1} parent=0 // pred_check_branch
    %1726 = sbr.rel (0) target = $region41
  $region40: #{cell_forward.1} parent=0 // pred_region
    _
  $region41: #{cell_forward.1} parent=0 // pred_fallthru
    _
  // Predicated region
  $region42: #{cell_forward.1} parent=0 // pred_check
    _
  $region43: #{cell_forward.1} parent=0 // pred_check_branch
    %1728 = sbr.rel (0) target = $region45
  $region44: #{cell_forward.1} parent=0 // pred_region
    _
  $region45: #{cell_forward.1} parent=0 // pred_fallthru
    _

</llo_original>
